<compile_context>
chip_gen: v5e
topology: v5e:2x2
jax: 0.10.0
libtpu: 0.0.40
codegen_flags: <defaults>
</compile_context>

<pallas_src>
import jax
import jax.numpy as jnp
from jax import lax
from jax.experimental import pallas as pl
from jax.experimental.pallas import tpu as pltpu


def lstm_kernel(x_ref, wih_ref, whh_ref, b_ref, h0_ref, c0_ref,
                y_ref, hn_ref, cn_ref, xg_sc):
    """Single-invocation LSTM recurrence.

    x_ref   : (T*B, I)   matmul dtype  -- all timesteps, batch-major per step
    wih_ref : (I, 4H)    matmul dtype  -- W_ih^T
    whh_ref : (H, 4H)    matmul dtype  -- W_hh^T
    b_ref   : (1, 4H)    f32           -- b_ih + b_hh
    h0/c0   : (B, H)     f32
    y_ref   : (T*B, H)   f32           -- lane-dense output slab (H >= 128)
    hn/cn   : (B, H)     f32
    xg_sc   : (T*B, 4H)  f32 scratch   -- pre-projected input gates
    """
    B, H = h0_ref.shape
    T = x_ref.shape[0] // B
    mm_dtype = whh_ref.dtype

    # (2) Hoisted input projection: one batched MXU matmul for all timesteps.
    xg_sc[...] = (
        jnp.dot(x_ref[...], wih_ref[...], preferred_element_type=jnp.float32)
        + b_ref[...])

    def step(t, carry):
        h, c = carry                                    # (B, H) f32
        row = pl.multiple_of(t * B, B)                  # sublane-aligned start

        # Recurrent projection only: (B, H) @ (H, 4H) -> (B, 4H), f32 accum.
        gates = xg_sc[pl.ds(row, B), :] + jnp.dot(
            h.astype(mm_dtype), whh_ref[...],
            preferred_element_type=jnp.float32)

        # (5) Two full-vreg EUP passes, then vreg-aligned static lane slices.
        sg = jax.nn.sigmoid(gates)
        th = jnp.tanh(gates)
        i_g = sg[:, 0 * H:1 * H]
        f_g = sg[:, 1 * H:2 * H]
        g_g = th[:, 2 * H:3 * H]
        o_g = sg[:, 3 * H:4 * H]

        c_new = f_g * c + i_g * g_g
        h_new = o_g * jnp.tanh(c_new)

        y_ref[pl.ds(row, B), :] = h_new                 # unmasked store (H>=128)
        return h_new, c_new

    h_fin, c_fin = lax.fori_loop(0, T, step,
                                 (h0_ref[...], c0_ref[...]), unroll=True)
    hn_ref[...] = h_fin
    cn_ref[...] = c_fin


def lstm_forward(x, w_ih, w_hh, b_ih, b_hh, h0, c0,
                 *, matmul_dtype=jnp.float32):
    """Pallas equivalent of the module forward: returns (y, (h_n, c_n)).

    x: (T, B, I); w_ih: (4H, I); w_hh: (4H, H); b_*: (4H,); h0/c0: (1, B, H).
    matmul_dtype: jnp.float32 or jnp.bfloat16 (MXU operands only; state math
    and accumulation stay f32).
    """
    T, B, I = x.shape
    H = w_hh.shape[1]

    # Pad batch to a full sublane group (multiple of 8 for f32).
    B_pad = max(8, ((B + 7) // 8) * 8)

    x_p = jnp.zeros((T, B_pad, I), jnp.float32).at[:, :B, :].set(
        jnp.asarray(x, jnp.float32))
    h0_p = jnp.zeros((B_pad, H), jnp.float32).at[:B, :].set(
        jnp.asarray(h0, jnp.float32)[0])
    c0_p = jnp.zeros((B_pad, H), jnp.float32).at[:B, :].set(
        jnp.asarray(c0, jnp.float32)[0])

    x2d = x_p.reshape(T * B_pad, I).astype(matmul_dtype)
    wih_t = jnp.asarray(w_ih, jnp.float32).T.astype(matmul_dtype)   # (I, 4H)
    whh_t = jnp.asarray(w_hh, jnp.float32).T.astype(matmul_dtype)   # (H, 4H)
    b = (jnp.asarray(b_ih, jnp.float32)
         + jnp.asarray(b_hh, jnp.float32)).reshape(1, 4 * H)

    n_in, n_out = 6, 3
    y2d, hn, cn = pl.pallas_call(
        lstm_kernel,
        out_shape=(jax.ShapeDtypeStruct((T * B_pad, H), jnp.float32),
                   jax.ShapeDtypeStruct((B_pad, H), jnp.float32),
                   jax.ShapeDtypeStruct((B_pad, H), jnp.float32)),
        # No grid: single invocation, everything whole-array resident in VMEM.
        in_specs=[pl.BlockSpec(memory_space=pltpu.MemorySpace.VMEM)] * n_in,
        out_specs=tuple(
            pl.BlockSpec(memory_space=pltpu.MemorySpace.VMEM)
            for _ in range(n_out)),
        scratch_shapes=[pltpu.VMEM((T * B_pad, 4 * H), jnp.float32)],
        compiler_params=pltpu.CompilerParams(
            vmem_limit_bytes=64 * 1024 * 1024),
    )(x2d, wih_t, whh_t, b, h0_p, c0_p)

    y = y2d.reshape(T, B_pad, H)[:, :B, :]
    return y, (hn[None, :B, :], cn[None, :B, :])


def lstm_reference(x, w_ih, w_hh, b_ih, b_hh, h0, c0):
    """Pure-JAX reference (same math as PyTorch nn.LSTM, 1 layer)."""
    H = w_hh.shape[1]
    b = b_ih + b_hh

    def step(carry, x_t):
        h, c = carry
        gates = x_t @ w_ih.T + h @ w_hh.T + b
        i = jax.nn.sigmoid(gates[:, 0 * H:1 * H])
        f = jax.nn.sigmoid(gates[:, 1 * H:2 * H])
        g = jnp.tanh(gates[:, 2 * H:3 * H])
        o = jax.nn.sigmoid(gates[:, 3 * H:4 * H])
        c_new = f * c + i * g
        h_new = o * jnp.tanh(c_new)
        return (h_new, c_new), h_new

    (h_n, c_n), ys = lax.scan(step, (h0[0], c0[0]), x)
    return ys, (h_n[None], c_n[None])


if __name__ == "__main__":
    # seq=8, batch=4 (padded to 8 inside the wrapper), in=16, hidden=128.
    # hidden chosen as one full lane group so y / h / c stores are unmasked.
    T, B, I, H = 8, 4, 16, 128

    key = jax.random.PRNGKey(0)
    k = jax.random.split(key, 5)
    bound = 1.0 / jnp.sqrt(H)   # PyTorch LSTM default init U(-1/sqrt(H), 1/sqrt(H))
    w_ih = jax.random.uniform(k[0], (4 * H, I), jnp.float32, -bound, bound)
    w_hh = jax.random.uniform(k[1], (4 * H, H), jnp.float32, -bound, bound)
    b_ih = jax.random.uniform(k[2], (4 * H,), jnp.float32, -bound, bound)
    b_hh = jax.random.uniform(k[3], (4 * H,), jnp.float32, -bound, bound)

    x = jax.random.normal(k[4], (T, B, I), jnp.float32)
    # get_initial_state: zeros of shape (num_layers=1, batch, hidden)
    h0 = jnp.zeros((1, B, H), jnp.float32)
    c0 = jnp.zeros((1, B, H), jnp.float32)

    y_ref, (h_ref, c_ref) = lstm_reference(x, w_ih, w_hh, b_ih, b_hh, h0, c0)

    # f32 matmul operands: tight check against the pure-JAX reference.
    y, (h_n, c_n) = lstm_forward(x, w_ih, w_hh, b_ih, b_hh, h0, c0)
    jax.block_until_ready((y, h_n, c_n))
    assert jnp.allclose(y, y_ref, atol=1e-5, rtol=1e-5)
    assert jnp.allclose(h_n, h_ref, atol=1e-5, rtol=1e-5)
    assert jnp.allclose(c_n, c_ref, atol=1e-5, rtol=1e-5)

    # bf16 matmul operands (bf16-native MXU on v5e/v6e/v7x); gate/state math
    # stays f32, so only the matmul rounding differs -> looser tolerance.
    y_bf, (h_bf, c_bf) = lstm_forward(x, w_ih, w_hh, b_ih, b_hh, h0, c0,
                                      matmul_dtype=jnp.bfloat16)
    jax.block_until_ready((y_bf, h_bf, c_bf))
    assert jnp.allclose(y_bf, y_ref, atol=5e-2, rtol=5e-2)
    assert jnp.allclose(h_bf, h_ref, atol=5e-2, rtol=5e-2)
    assert jnp.allclose(c_bf, c_ref, atol=5e-2, rtol=5e-2)

    print("KERNEL_OK")
</pallas_src>

<mosaic_0001>
module attributes {stable_mosaic.version = 11 : i64} {
  func.func @lstm_kernel(%arg0: memref<64x16xf32, #tpu.memory_space<vmem>>, %arg1: memref<16x512xf32, #tpu.memory_space<vmem>>, %arg2: memref<128x512xf32, #tpu.memory_space<vmem>>, %arg3: memref<1x512xf32, #tpu.memory_space<vmem>>, %arg4: memref<8x128xf32, #tpu.memory_space<vmem>>, %arg5: memref<8x128xf32, #tpu.memory_space<vmem>>, %arg6: memref<64x128xf32, #tpu.memory_space<vmem>>, %arg7: memref<8x128xf32, #tpu.memory_space<vmem>>, %arg8: memref<8x128xf32, #tpu.memory_space<vmem>>, %arg9: memref<64x512xf32, #tpu.memory_space<vmem>>) attributes {dimension_semantics = [], scalar_prefetch = 0 : i64, scratch_operands = 1 : i64, tpu.core_type = #tpu.core_type<tc>} {
    %c0 = arith.constant 0 : index
    %c0_0 = arith.constant 0 : index
    %0 = vector.load %arg0[%c0, %c0_0] : memref<64x16xf32, #tpu.memory_space<vmem>>, vector<64x16xf32>
    %c0_1 = arith.constant 0 : index
    %c0_2 = arith.constant 0 : index
    %1 = vector.load %arg1[%c0_1, %c0_2] : memref<16x512xf32, #tpu.memory_space<vmem>>, vector<16x512xf32>
    %cst = arith.constant dense<0.000000e+00> : vector<64x512xf32>
    %2 = tpu.matmul %0, %1, %cst {dimension_numbers = #tpu.dot_dimension_numbers<[1], [0], [0], [1], [0, 0, 1, 1], [], []>} : vector<64x16xf32>, vector<16x512xf32>, vector<64x512xf32> -> vector<64x512xf32>
    %c0_3 = arith.constant 0 : index
    %c0_4 = arith.constant 0 : index
    %3 = vector.load %arg3[%c0_3, %c0_4] : memref<1x512xf32, #tpu.memory_space<vmem>>, vector<1x512xf32>
    %4 = vector.broadcast %3 : vector<1x512xf32> to vector<64x512xf32>
    %5 = arith.addf %2, %4 : vector<64x512xf32>
    %c0_5 = arith.constant 0 : index
    %c0_6 = arith.constant 0 : index
    %6 = vector.load %arg9[%c0_5, %c0_6] : memref<64x512xf32, #tpu.memory_space<vmem>>, vector<64x512xf32>
    tpu.vector_store %arg9[%c0_5, %c0_6], %5 {strides = array<i32>} : memref<64x512xf32, #tpu.memory_space<vmem>>, vector<64x512xf32>,
    %c0_7 = arith.constant 0 : index
    %c0_8 = arith.constant 0 : index
    %7 = vector.load %arg4[%c0_7, %c0_8] : memref<8x128xf32, #tpu.memory_space<vmem>>, vector<8x128xf32>
    %c0_9 = arith.constant 0 : index
    %c0_10 = arith.constant 0 : index
    %8 = vector.load %arg5[%c0_9, %c0_10] : memref<8x128xf32, #tpu.memory_space<vmem>>, vector<8x128xf32>
    %c0_i32 = arith.constant 0 : i32
    %c8_i32 = arith.constant 8 : i32
    %9 = arith.muli %c0_i32, %c8_i32 : i32
    %10 = tpu.assume_multiple %9, 8 : i32
    %11 = arith.index_cast %10 : i32 to index
    %c0_11 = arith.constant 0 : index
    %12 = vector.load %arg9[%11, %c0_11] : memref<64x512xf32, #tpu.memory_space<vmem>>, vector<8x512xf32>
    %c0_12 = arith.constant 0 : index
    %c0_13 = arith.constant 0 : index
    %13 = vector.load %arg2[%c0_12, %c0_13] : memref<128x512xf32, #tpu.memory_space<vmem>>, vector<128x512xf32>
    %cst_14 = arith.constant dense<0.000000e+00> : vector<8x512xf32>
    %14 = tpu.matmul %7, %13, %cst_14 {dimension_numbers = #tpu.dot_dimension_numbers<[1], [0], [0], [1], [0, 0, 1, 1], [], []>} : vector<8x128xf32>, vector<128x512xf32>, vector<8x512xf32> -> vector<8x512xf32>
    %15 = arith.addf %12, %14 : vector<8x512xf32>
    %16 = arith.negf %15 : vector<8x512xf32>
    %17 = math.exp %16 : vector<8x512xf32>
    %cst_15 = arith.constant 1.000000e+00 : f32
    %18 = vector.broadcast %cst_15 : f32 to vector<8x512xf32>
    %19 = arith.addf %18, %17 : vector<8x512xf32>
    %20 = arith.divf %18, %19 : vector<8x512xf32>
    %21 = math.tanh %15 : vector<8x512xf32>
    %22 = vector.extract_strided_slice %20 {offsets = [0, 0], sizes = [8, 128], strides = [1, 1]} : vector<8x512xf32> to vector<8x128xf32>
    %23 = vector.extract_strided_slice %20 {offsets = [0, 128], sizes = [8, 128], strides = [1, 1]} : vector<8x512xf32> to vector<8x128xf32>
    %24 = vector.extract_strided_slice %21 {offsets = [0, 256], sizes = [8, 128], strides = [1, 1]} : vector<8x512xf32> to vector<8x128xf32>
    %25 = vector.extract_strided_slice %20 {offsets = [0, 384], sizes = [8, 128], strides = [1, 1]} : vector<8x512xf32> to vector<8x128xf32>
    %26 = arith.mulf %23, %8 : vector<8x128xf32>
    %27 = arith.mulf %22, %24 : vector<8x128xf32>
    %28 = arith.addf %26, %27 : vector<8x128xf32>
    %29 = math.tanh %28 : vector<8x128xf32>
    %30 = arith.mulf %25, %29 : vector<8x128xf32>
    %31 = arith.index_cast %10 : i32 to index
    %c0_16 = arith.constant 0 : index
    %32 = vector.load %arg6[%31, %c0_16] : memref<64x128xf32, #tpu.memory_space<vmem>>, vector<8x128xf32>
    tpu.vector_store %arg6[%31, %c0_16], %30 {strides = array<i32>} : memref<64x128xf32, #tpu.memory_space<vmem>>, vector<8x128xf32>,
    %c1_i32 = arith.constant 1 : i32
    %c8_i32_17 = arith.constant 8 : i32
    %33 = arith.muli %c1_i32, %c8_i32_17 : i32
    %34 = tpu.assume_multiple %33, 8 : i32
    %35 = arith.index_cast %34 : i32 to index
    %c0_18 = arith.constant 0 : index
    %36 = vector.load %arg9[%35, %c0_18] : memref<64x512xf32, #tpu.memory_space<vmem>>, vector<8x512xf32>
    %c0_19 = arith.constant 0 : index
    %c0_20 = arith.constant 0 : index
    %37 = vector.load %arg2[%c0_19, %c0_20] : memref<128x512xf32, #tpu.memory_space<vmem>>, vector<128x512xf32>
    %cst_21 = arith.constant dense<0.000000e+00> : vector<8x512xf32>
    %38 = tpu.matmul %30, %37, %cst_21 {dimension_numbers = #tpu.dot_dimension_numbers<[1], [0], [0], [1], [0, 0, 1, 1], [], []>} : vector<8x128xf32>, vector<128x512xf32>, vector<8x512xf32> -> vector<8x512xf32>
    %39 = arith.addf %36, %38 : vector<8x512xf32>
    %40 = arith.negf %39 : vector<8x512xf32>
    %41 = math.exp %40 : vector<8x512xf32>
    %cst_22 = arith.constant 1.000000e+00 : f32
    %42 = vector.broadcast %cst_22 : f32 to vector<8x512xf32>
    %43 = arith.addf %42, %41 : vector<8x512xf32>
    %44 = arith.divf %42, %43 : vector<8x512xf32>
    %45 = math.tanh %39 : vector<8x512xf32>
    %46 = vector.extract_strided_slice %44 {offsets = [0, 0], sizes = [8, 128], strides = [1, 1]} : vector<8x512xf32> to vector<8x128xf32>
    %47 = vector.extract_strided_slice %44 {offsets = [0, 128], sizes = [8, 128], strides = [1, 1]} : vector<8x512xf32> to vector<8x128xf32>
    %48 = vector.extract_strided_slice %45 {offsets = [0, 256], sizes = [8, 128], strides = [1, 1]} : vector<8x512xf32> to vector<8x128xf32>
    %49 = vector.extract_strided_slice %44 {offsets = [0, 384], sizes = [8, 128], strides = [1, 1]} : vector<8x512xf32> to vector<8x128xf32>
    %50 = arith.mulf %47, %28 : vector<8x128xf32>
    %51 = arith.mulf %46, %48 : vector<8x128xf32>
    %52 = arith.addf %50, %51 : vector<8x128xf32>
    %53 = math.tanh %52 : vector<8x128xf32>
    %54 = arith.mulf %49, %53 : vector<8x128xf32>
    %55 = arith.index_cast %34 : i32 to index
    %c0_23 = arith.constant 0 : index
    %56 = vector.load %arg6[%55, %c0_23] : memref<64x128xf32, #tpu.memory_space<vmem>>, vector<8x128xf32>
    tpu.vector_store %arg6[%55, %c0_23], %54 {strides = array<i32>} : memref<64x128xf32, #tpu.memory_space<vmem>>, vector<8x128xf32>,
    %c2_i32 = arith.constant 2 : i32
    %c8_i32_24 = arith.constant 8 : i32
    %57 = arith.muli %c2_i32, %c8_i32_24 : i32
    %58 = tpu.assume_multiple %57, 8 : i32
    %59 = arith.index_cast %58 : i32 to index
    %c0_25 = arith.constant 0 : index
    %60 = vector.load %arg9[%59, %c0_25] : memref<64x512xf32, #tpu.memory_space<vmem>>, vector<8x512xf32>
    %c0_26 = arith.constant 0 : index
    %c0_27 = arith.constant 0 : index
    %61 = vector.load %arg2[%c0_26, %c0_27] : memref<128x512xf32, #tpu.memory_space<vmem>>, vector<128x512xf32>
    %cst_28 = arith.constant dense<0.000000e+00> : vector<8x512xf32>
    %62 = tpu.matmul %54, %61, %cst_28 {dimension_numbers = #tpu.dot_dimension_numbers<[1], [0], [0], [1], [0, 0, 1, 1], [], []>} : vector<8x128xf32>, vector<128x512xf32>, vector<8x512xf32> -> vector<8x512xf32>
    %63 = arith.addf %60, %62 : vector<8x512xf32>
    %64 = arith.negf %63 : vector<8x512xf32>
    %65 = math.exp %64 : vector<8x512xf32>
    %cst_29 = arith.constant 1.000000e+00 : f32
    %66 = vector.broadcast %cst_29 : f32 to vector<8x512xf32>
    %67 = arith.addf %66, %65 : vector<8x512xf32>
    %68 = arith.divf %66, %67 : vector<8x512xf32>
    %69 = math.tanh %63 : vector<8x512xf32>
    %70 = vector.extract_strided_slice %68 {offsets = [0, 0], sizes = [8, 128], strides = [1, 1]} : vector<8x512xf32> to vector<8x128xf32>
    %71 = vector.extract_strided_slice %68 {offsets = [0, 128], sizes = [8, 128], strides = [1, 1]} : vector<8x512xf32> to vector<8x128xf32>
    %72 = vector.extract_strided_slice %69 {offsets = [0, 256], sizes = [8, 128], strides = [1, 1]} : vector<8x512xf32> to vector<8x128xf32>
    %73 = vector.extract_strided_slice %68 {offsets = [0, 384], sizes = [8, 128], strides = [1, 1]} : vector<8x512xf32> to vector<8x128xf32>
    %74 = arith.mulf %71, %52 : vector<8x128xf32>
    %75 = arith.mulf %70, %72 : vector<8x128xf32>
    %76 = arith.addf %74, %75 : vector<8x128xf32>
    %77 = math.tanh %76 : vector<8x128xf32>
    %78 = arith.mulf %73, %77 : vector<8x128xf32>
    %79 = arith.index_cast %58 : i32 to index
    %c0_30 = arith.constant 0 : index
    %80 = vector.load %arg6[%79, %c0_30] : memref<64x128xf32, #tpu.memory_space<vmem>>, vector<8x128xf32>
    tpu.vector_store %arg6[%79, %c0_30], %78 {strides = array<i32>} : memref<64x128xf32, #tpu.memory_space<vmem>>, vector<8x128xf32>,
    %c3_i32 = arith.constant 3 : i32
    %c8_i32_31 = arith.constant 8 : i32
    %81 = arith.muli %c3_i32, %c8_i32_31 : i32
    %82 = tpu.assume_multiple %81, 8 : i32
    %83 = arith.index_cast %82 : i32 to index
    %c0_32 = arith.constant 0 : index
    %84 = vector.load %arg9[%83, %c0_32] : memref<64x512xf32, #tpu.memory_space<vmem>>, vector<8x512xf32>
    %c0_33 = arith.constant 0 : index
    %c0_34 = arith.constant 0 : index
    %85 = vector.load %arg2[%c0_33, %c0_34] : memref<128x512xf32, #tpu.memory_space<vmem>>, vector<128x512xf32>
    %cst_35 = arith.constant dense<0.000000e+00> : vector<8x512xf32>
    %86 = tpu.matmul %78, %85, %cst_35 {dimension_numbers = #tpu.dot_dimension_numbers<[1], [0], [0], [1], [0, 0, 1, 1], [], []>} : vector<8x128xf32>, vector<128x512xf32>, vector<8x512xf32> -> vector<8x512xf32>
    %87 = arith.addf %84, %86 : vector<8x512xf32>
    %88 = arith.negf %87 : vector<8x512xf32>
    %89 = math.exp %88 : vector<8x512xf32>
    %cst_36 = arith.constant 1.000000e+00 : f32
    %90 = vector.broadcast %cst_36 : f32 to vector<8x512xf32>
    %91 = arith.addf %90, %89 : vector<8x512xf32>
    %92 = arith.divf %90, %91 : vector<8x512xf32>
    %93 = math.tanh %87 : vector<8x512xf32>
    %94 = vector.extract_strided_slice %92 {offsets = [0, 0], sizes = [8, 128], strides = [1, 1]} : vector<8x512xf32> to vector<8x128xf32>
    %95 = vector.extract_strided_slice %92 {offsets = [0, 128], sizes = [8, 128], strides = [1, 1]} : vector<8x512xf32> to vector<8x128xf32>
    %96 = vector.extract_strided_slice %93 {offsets = [0, 256], sizes = [8, 128], strides = [1, 1]} : vector<8x512xf32> to vector<8x128xf32>
    %97 = vector.extract_strided_slice %92 {offsets = [0, 384], sizes = [8, 128], strides = [1, 1]} : vector<8x512xf32> to vector<8x128xf32>
    %98 = arith.mulf %95, %76 : vector<8x128xf32>
    %99 = arith.mulf %94, %96 : vector<8x128xf32>
    %100 = arith.addf %98, %99 : vector<8x128xf32>
    %101 = math.tanh %100 : vector<8x128xf32>
    %102 = arith.mulf %97, %101 : vector<8x128xf32>
    %103 = arith.index_cast %82 : i32 to index
    %c0_37 = arith.constant 0 : index
    %104 = vector.load %arg6[%103, %c0_37] : memref<64x128xf32, #tpu.memory_space<vmem>>, vector<8x128xf32>
    tpu.vector_store %arg6[%103, %c0_37], %102 {strides = array<i32>} : memref<64x128xf32, #tpu.memory_space<vmem>>, vector<8x128xf32>,
    %c4_i32 = arith.constant 4 : i32
    %c8_i32_38 = arith.constant 8 : i32
    %105 = arith.muli %c4_i32, %c8_i32_38 : i32
    %106 = tpu.assume_multiple %105, 8 : i32
    %107 = arith.index_cast %106 : i32 to index
    %c0_39 = arith.constant 0 : index
    %108 = vector.load %arg9[%107, %c0_39] : memref<64x512xf32, #tpu.memory_space<vmem>>, vector<8x512xf32>
    %c0_40 = arith.constant 0 : index
    %c0_41 = arith.constant 0 : index
    %109 = vector.load %arg2[%c0_40, %c0_41] : memref<128x512xf32, #tpu.memory_space<vmem>>, vector<128x512xf32>
    %cst_42 = arith.constant dense<0.000000e+00> : vector<8x512xf32>
    %110 = tpu.matmul %102, %109, %cst_42 {dimension_numbers = #tpu.dot_dimension_numbers<[1], [0], [0], [1], [0, 0, 1, 1], [], []>} : vector<8x128xf32>, vector<128x512xf32>, vector<8x512xf32> -> vector<8x512xf32>
    %111 = arith.addf %108, %110 : vector<8x512xf32>
    %112 = arith.negf %111 : vector<8x512xf32>
    %113 = math.exp %112 : vector<8x512xf32>
    %cst_43 = arith.constant 1.000000e+00 : f32
    %114 = vector.broadcast %cst_43 : f32 to vector<8x512xf32>
    %115 = arith.addf %114, %113 : vector<8x512xf32>
    %116 = arith.divf %114, %115 : vector<8x512xf32>
    %117 = math.tanh %111 : vector<8x512xf32>
    %118 = vector.extract_strided_slice %116 {offsets = [0, 0], sizes = [8, 128], strides = [1, 1]} : vector<8x512xf32> to vector<8x128xf32>
    %119 = vector.extract_strided_slice %116 {offsets = [0, 128], sizes = [8, 128], strides = [1, 1]} : vector<8x512xf32> to vector<8x128xf32>
    %120 = vector.extract_strided_slice %117 {offsets = [0, 256], sizes = [8, 128], strides = [1, 1]} : vector<8x512xf32> to vector<8x128xf32>
    %121 = vector.extract_strided_slice %116 {offsets = [0, 384], sizes = [8, 128], strides = [1, 1]} : vector<8x512xf32> to vector<8x128xf32>
    %122 = arith.mulf %119, %100 : vector<8x128xf32>
    %123 = arith.mulf %118, %120 : vector<8x128xf32>
    %124 = arith.addf %122, %123 : vector<8x128xf32>
    %125 = math.tanh %124 : vector<8x128xf32>
    %126 = arith.mulf %121, %125 : vector<8x128xf32>
    %127 = arith.index_cast %106 : i32 to index
    %c0_44 = arith.constant 0 : index
    %128 = vector.load %arg6[%127, %c0_44] : memref<64x128xf32, #tpu.memory_space<vmem>>, vector<8x128xf32>
    tpu.vector_store %arg6[%127, %c0_44], %126 {strides = array<i32>} : memref<64x128xf32, #tpu.memory_space<vmem>>, vector<8x128xf32>,
    %c5_i32 = arith.constant 5 : i32
    %c8_i32_45 = arith.constant 8 : i32
    %129 = arith.muli %c5_i32, %c8_i32_45 : i32
    %130 = tpu.assume_multiple %129, 8 : i32
    %131 = arith.index_cast %130 : i32 to index
    %c0_46 = arith.constant 0 : index
    %132 = vector.load %arg9[%131, %c0_46] : memref<64x512xf32, #tpu.memory_space<vmem>>, vector<8x512xf32>
    %c0_47 = arith.constant 0 : index
    %c0_48 = arith.constant 0 : index
    %133 = vector.load %arg2[%c0_47, %c0_48] : memref<128x512xf32, #tpu.memory_space<vmem>>, vector<128x512xf32>
    %cst_49 = arith.constant dense<0.000000e+00> : vector<8x512xf32>
    %134 = tpu.matmul %126, %133, %cst_49 {dimension_numbers = #tpu.dot_dimension_numbers<[1], [0], [0], [1], [0, 0, 1, 1], [], []>} : vector<8x128xf32>, vector<128x512xf32>, vector<8x512xf32> -> vector<8x512xf32>
    %135 = arith.addf %132, %134 : vector<8x512xf32>
    %136 = arith.negf %135 : vector<8x512xf32>
    %137 = math.exp %136 : vector<8x512xf32>
    %cst_50 = arith.constant 1.000000e+00 : f32
    %138 = vector.broadcast %cst_50 : f32 to vector<8x512xf32>
    %139 = arith.addf %138, %137 : vector<8x512xf32>
    %140 = arith.divf %138, %139 : vector<8x512xf32>
    %141 = math.tanh %135 : vector<8x512xf32>
    %142 = vector.extract_strided_slice %140 {offsets = [0, 0], sizes = [8, 128], strides = [1, 1]} : vector<8x512xf32> to vector<8x128xf32>
    %143 = vector.extract_strided_slice %140 {offsets = [0, 128], sizes = [8, 128], strides = [1, 1]} : vector<8x512xf32> to vector<8x128xf32>
    %144 = vector.extract_strided_slice %141 {offsets = [0, 256], sizes = [8, 128], strides = [1, 1]} : vector<8x512xf32> to vector<8x128xf32>
    %145 = vector.extract_strided_slice %140 {offsets = [0, 384], sizes = [8, 128], strides = [1, 1]} : vector<8x512xf32> to vector<8x128xf32>
    %146 = arith.mulf %143, %124 : vector<8x128xf32>
    %147 = arith.mulf %142, %144 : vector<8x128xf32>
    %148 = arith.addf %146, %147 : vector<8x128xf32>
    %149 = math.tanh %148 : vector<8x128xf32>
    %150 = arith.mulf %145, %149 : vector<8x128xf32>
    %151 = arith.index_cast %130 : i32 to index
    %c0_51 = arith.constant 0 : index
    %152 = vector.load %arg6[%151, %c0_51] : memref<64x128xf32, #tpu.memory_space<vmem>>, vector<8x128xf32>
    tpu.vector_store %arg6[%151, %c0_51], %150 {strides = array<i32>} : memref<64x128xf32, #tpu.memory_space<vmem>>, vector<8x128xf32>,
    %c6_i32 = arith.constant 6 : i32
    %c8_i32_52 = arith.constant 8 : i32
    %153 = arith.muli %c6_i32, %c8_i32_52 : i32
    %154 = tpu.assume_multiple %153, 8 : i32
    %155 = arith.index_cast %154 : i32 to index
    %c0_53 = arith.constant 0 : index
    %156 = vector.load %arg9[%155, %c0_53] : memref<64x512xf32, #tpu.memory_space<vmem>>, vector<8x512xf32>
    %c0_54 = arith.constant 0 : index
    %c0_55 = arith.constant 0 : index
    %157 = vector.load %arg2[%c0_54, %c0_55] : memref<128x512xf32, #tpu.memory_space<vmem>>, vector<128x512xf32>
    %cst_56 = arith.constant dense<0.000000e+00> : vector<8x512xf32>
    %158 = tpu.matmul %150, %157, %cst_56 {dimension_numbers = #tpu.dot_dimension_numbers<[1], [0], [0], [1], [0, 0, 1, 1], [], []>} : vector<8x128xf32>, vector<128x512xf32>, vector<8x512xf32> -> vector<8x512xf32>
    %159 = arith.addf %156, %158 : vector<8x512xf32>
    %160 = arith.negf %159 : vector<8x512xf32>
    %161 = math.exp %160 : vector<8x512xf32>
    %cst_57 = arith.constant 1.000000e+00 : f32
    %162 = vector.broadcast %cst_57 : f32 to vector<8x512xf32>
    %163 = arith.addf %162, %161 : vector<8x512xf32>
    %164 = arith.divf %162, %163 : vector<8x512xf32>
    %165 = math.tanh %159 : vector<8x512xf32>
    %166 = vector.extract_strided_slice %164 {offsets = [0, 0], sizes = [8, 128], strides = [1, 1]} : vector<8x512xf32> to vector<8x128xf32>
    %167 = vector.extract_strided_slice %164 {offsets = [0, 128], sizes = [8, 128], strides = [1, 1]} : vector<8x512xf32> to vector<8x128xf32>
    %168 = vector.extract_strided_slice %165 {offsets = [0, 256], sizes = [8, 128], strides = [1, 1]} : vector<8x512xf32> to vector<8x128xf32>
    %169 = vector.extract_strided_slice %164 {offsets = [0, 384], sizes = [8, 128], strides = [1, 1]} : vector<8x512xf32> to vector<8x128xf32>
    %170 = arith.mulf %167, %148 : vector<8x128xf32>
    %171 = arith.mulf %166, %168 : vector<8x128xf32>
    %172 = arith.addf %170, %171 : vector<8x128xf32>
    %173 = math.tanh %172 : vector<8x128xf32>
    %174 = arith.mulf %169, %173 : vector<8x128xf32>
    %175 = arith.index_cast %154 : i32 to index
    %c0_58 = arith.constant 0 : index
    %176 = vector.load %arg6[%175, %c0_58] : memref<64x128xf32, #tpu.memory_space<vmem>>, vector<8x128xf32>
    tpu.vector_store %arg6[%175, %c0_58], %174 {strides = array<i32>} : memref<64x128xf32, #tpu.memory_space<vmem>>, vector<8x128xf32>,
    %c7_i32 = arith.constant 7 : i32
    %c8_i32_59 = arith.constant 8 : i32
    %177 = arith.muli %c7_i32, %c8_i32_59 : i32
    %178 = tpu.assume_multiple %177, 8 : i32
    %179 = arith.index_cast %178 : i32 to index
    %c0_60 = arith.constant 0 : index
    %180 = vector.load %arg9[%179, %c0_60] : memref<64x512xf32, #tpu.memory_space<vmem>>, vector<8x512xf32>
    %c0_61 = arith.constant 0 : index
    %c0_62 = arith.constant 0 : index
    %181 = vector.load %arg2[%c0_61, %c0_62] : memref<128x512xf32, #tpu.memory_space<vmem>>, vector<128x512xf32>
    %cst_63 = arith.constant dense<0.000000e+00> : vector<8x512xf32>
    %182 = tpu.matmul %174, %181, %cst_63 {dimension_numbers = #tpu.dot_dimension_numbers<[1], [0], [0], [1], [0, 0, 1, 1], [], []>} : vector<8x128xf32>, vector<128x512xf32>, vector<8x512xf32> -> vector<8x512xf32>
    %183 = arith.addf %180, %182 : vector<8x512xf32>
    %184 = arith.negf %183 : vector<8x512xf32>
    %185 = math.exp %184 : vector<8x512xf32>
    %cst_64 = arith.constant 1.000000e+00 : f32
    %186 = vector.broadcast %cst_64 : f32 to vector<8x512xf32>
    %187 = arith.addf %186, %185 : vector<8x512xf32>
    %188 = arith.divf %186, %187 : vector<8x512xf32>
    %189 = math.tanh %183 : vector<8x512xf32>
    %190 = vector.extract_strided_slice %188 {offsets = [0, 0], sizes = [8, 128], strides = [1, 1]} : vector<8x512xf32> to vector<8x128xf32>
    %191 = vector.extract_strided_slice %188 {offsets = [0, 128], sizes = [8, 128], strides = [1, 1]} : vector<8x512xf32> to vector<8x128xf32>
    %192 = vector.extract_strided_slice %189 {offsets = [0, 256], sizes = [8, 128], strides = [1, 1]} : vector<8x512xf32> to vector<8x128xf32>
    %193 = vector.extract_strided_slice %188 {offsets = [0, 384], sizes = [8, 128], strides = [1, 1]} : vector<8x512xf32> to vector<8x128xf32>
    %194 = arith.mulf %191, %172 : vector<8x128xf32>
    %195 = arith.mulf %190, %192 : vector<8x128xf32>
    %196 = arith.addf %194, %195 : vector<8x128xf32>
    %197 = math.tanh %196 : vector<8x128xf32>
    %198 = arith.mulf %193, %197 : vector<8x128xf32>
    %199 = arith.index_cast %178 : i32 to index
    %c0_65 = arith.constant 0 : index
    %200 = vector.load %arg6[%199, %c0_65] : memref<64x128xf32, #tpu.memory_space<vmem>>, vector<8x128xf32>
    tpu.vector_store %arg6[%199, %c0_65], %198 {strides = array<i32>} : memref<64x128xf32, #tpu.memory_space<vmem>>, vector<8x128xf32>,
    %c8_i32_66 = arith.constant 8 : i32
    %c0_67 = arith.constant 0 : index
    %c0_68 = arith.constant 0 : index
    %201 = vector.load %arg7[%c0_67, %c0_68] : memref<8x128xf32, #tpu.memory_space<vmem>>, vector<8x128xf32>
    tpu.vector_store %arg7[%c0_67, %c0_68], %198 {strides = array<i32>} : memref<8x128xf32, #tpu.memory_space<vmem>>, vector<8x128xf32>,
    %c0_69 = arith.constant 0 : index
    %c0_70 = arith.constant 0 : index
    %202 = vector.load %arg8[%c0_69, %c0_70] : memref<8x128xf32, #tpu.memory_space<vmem>>, vector<8x128xf32>
    tpu.vector_store %arg8[%c0_69, %c0_70], %196 {strides = array<i32>} : memref<8x128xf32, #tpu.memory_space<vmem>>, vector<8x128xf32>,
    return
  }
}

</mosaic_0001>

<llo_original>
// kernel: tpu_custom_call.1
$region0: #{tpu_custom_call.1}
  #allocation0 [shape = 'u32[]', space=smem, size = 0x4, offset = 0x4, fixed_abs, tag = 'smem constant byte address 0x4 - core index']
  #allocation1 [shape = 'u32[72,128]{1,0:T(1,128)}', space=vmem, size = 0x9000, scoped, tag = 'internal scratch']
  #allocation2 [shape = 'f32[64,512]{1,0:T(8,128)}', space=vmem, size = 0x20000, scoped, tag = 'scratch operand']
  %s0 = inlined_call_operand.vmem [shape: f32[64,16], index: 0, kind: input, shape index: {}]
  %s1 = inlined_call_operand.vmem [shape: f32[16,512], index: 1, kind: input, shape index: {}]
  %s2 = inlined_call_operand.hbm [shape: f32[128,512], index: 2, kind: input, shape index: {}]
  %s3 = inlined_call_operand.hbm [shape: f32[1,512], index: 3, kind: input, shape index: {}]
  %s4 = inlined_call_operand.vmem [shape: f32[8,128], index: 4, kind: input, shape index: {}]
  %s5 = inlined_call_operand.vmem [shape: f32[8,128], index: 5, kind: input, shape index: {}]
  %s6 = inlined_call_operand.hbm [shape: f32[64,128], index: 6, kind: output, shape index: {0}]
  %s7 = inlined_call_operand.hbm [shape: f32[8,128], index: 7, kind: output, shape index: {1}]
  %s8 = inlined_call_operand.hbm [shape: f32[8,128], index: 8, kind: output, shape index: {2}]
  %9 = xla_tuple %s6, %s7, %s8
  %s10 = sld [smem:[#allocation0]]
  $region58: #{tpu_custom_call.1} parent=0
    _
  %s12 = ssub.s32 1, %s10
  %s13 = scalar_select 0, %s12, %s10
  $region1: #{tpu_custom_call.1} parent=0
    #allocation3 [shape = 'u8[262144]{0}', space=vmem, size = 0x40000, scoped, tag = 'input window, operand 2, single buffered']
    #allocation4 [shape = 's32[1]{0}', space=sflag, size = 0x4, scoped, tag = 'scoped memory for tpu_custom_call.1']
    #allocation5 [shape = 's32[1]{0}', space=sflag, size = 0x4, scoped, tag = 'scoped memory for tpu_custom_call.1']
    #allocation6 [shape = 'u8[2048]{0}', space=vmem, size = 0x800, scoped, tag = 'input window, operand 3, single buffered']
    #allocation7 [shape = 's32[1]{0}', space=sflag, size = 0x4, scoped, tag = 'scoped memory for tpu_custom_call.1']
    #allocation8 [shape = 'u8[32768]{0}', space=vmem, size = 0x8000, scoped, tag = 'output window, operand 0, single buffered']
    #allocation9 [shape = 'u8[4096]{0}', space=vmem, size = 0x1000, scoped, tag = 'output window, operand 1, single buffered']
    #allocation10 [shape = 's32[1]{0}', space=sflag, size = 0x4, scoped, tag = 'scoped memory for tpu_custom_call.1']
    #allocation11 [shape = 'u8[4096]{0}', space=vmem, size = 0x1000, scoped, tag = 'output window, operand 2, single buffered']
    %14 = vsyncpa [#allocation4], 0
    %15 = vsyncpa [#allocation7], 0
    %16 = vsyncpa [#allocation5], 0
    %17 = vsyncpa [#allocation10], 0
    // Predicated region
    $region2: #{tpu_custom_call.1} parent=1 // pred_check
      _
    $region3: #{tpu_custom_call.1} parent=1 // pred_check_branch
      %19 = sbr.rel (0) target = $region5
    $region4: #{tpu_custom_call.1} parent=1 // pred_region
      _
    $region5: #{tpu_custom_call.1} parent=1 // pred_fallthru
      _
    // Predicated region
    $region6: #{tpu_custom_call.1} parent=1 // pred_check
      _
    $region7: #{tpu_custom_call.1} parent=1 // pred_check_branch
      %21 = sbr.rel (0) target = $region9
    $region8: #{tpu_custom_call.1} parent=1 // pred_region
      _
    $region9: #{tpu_custom_call.1} parent=1 // pred_fallthru
      _
    // Predicated region
    $region10: #{tpu_custom_call.1} parent=1 // pred_check
      _
    $region11: #{tpu_custom_call.1} parent=1 // pred_check_branch
      %23 = sbr.rel (0) target = $region13
    $region12: #{tpu_custom_call.1} parent=1 // pred_region
      %25 = vsyncadd [#allocation4], 0
      %s26 = sshll.u32 %s2, 4
      %s27 = int_to_ptr.hbm [resolvable:$true] %s26
      %s28 = sshll.u32 [#allocation3], 4
      %s29 = int_to_ptr.vmem [resolvable:$true] %s28
      %34 = dma.hbm_to_vmem [thread:$0]  %s27, 8192, %s29, [#allocation4], 512, 512, 32
    $region13: #{tpu_custom_call.1} parent=1 // pred_fallthru
      _
    // Predicated region
    $region14: #{tpu_custom_call.1} parent=1 // pred_check
      _
    $region15: #{tpu_custom_call.1} parent=1 // pred_check_branch
      %36 = sbr.rel (0) target = $region17
    $region16: #{tpu_custom_call.1} parent=1 // pred_region
      %38 = vsyncadd [#allocation7], 0
      %s40 = sshll.u32 %s3, 4
      %s41 = int_to_ptr.hbm [resolvable:$true] %s40
      %s42 = sshll.u32 [#allocation6], 4
      %s43 = int_to_ptr.vmem [resolvable:$true] %s42
      %45 = dma.hbm_to_vmem [thread:$0]  %s41, 64, %s43, [#allocation7]
    $region17: #{tpu_custom_call.1} parent=1 // pred_fallthru
      _
    // Predicated region
    $region18: #{tpu_custom_call.1} parent=1 // pred_check
      _
    $region19: #{tpu_custom_call.1} parent=1 // pred_check_branch
      %47 = sbr.rel (0) target = $region21
    $region20: #{tpu_custom_call.1} parent=1 // pred_region
      _
    $region21: #{tpu_custom_call.1} parent=1 // pred_fallthru
      _
    // Predicated region
    $region22: #{tpu_custom_call.1} parent=1 // pred_check
      _
    $region23: #{tpu_custom_call.1} parent=1 // pred_check_branch
      %49 = sbr.rel (0) target = $region25
    $region24: #{tpu_custom_call.1} parent=1 // pred_region
      _
    $region25: #{tpu_custom_call.1} parent=1 // pred_fallthru
      _
    // Predicated region
    $region26: #{tpu_custom_call.1} parent=1 // pred_check
      _
    $region27: #{tpu_custom_call.1} parent=1 // pred_check_branch
      %51 = sbr.rel (0) target = $region29
    $region28: #{tpu_custom_call.1} parent=1 // pred_region
      %53 = dma.done [#allocation4], 8192
    $region29: #{tpu_custom_call.1} parent=1 // pred_fallthru
      _
    // Predicated region
    $region30: #{tpu_custom_call.1} parent=1 // pred_check
      _
    $region31: #{tpu_custom_call.1} parent=1 // pred_check_branch
      %55 = sbr.rel (0) target = $region33
    $region32: #{tpu_custom_call.1} parent=1 // pred_region
      %57 = dma.done [#allocation7], 64
    $region33: #{tpu_custom_call.1} parent=1 // pred_fallthru
      _
    %v58 = vld [vmem:[%s0] sm:$0xff]
    %v59 = vld [vmem:[%s0 + $0x8] sm:$0xff]
    %v60 = vld [vmem:[%s0 + $0x10] sm:$0xff]
    %v61 = vld [vmem:[%s0 + $0x18] sm:$0xff]
    %v62 = vld [vmem:[%s0 + $0x20] sm:$0xff]
    %v63 = vld [vmem:[%s0 + $0x28] sm:$0xff]
    %v64 = vld [vmem:[%s0 + $0x30] sm:$0xff]
    %v65 = vld [vmem:[%s0 + $0x38] sm:$0xff]
    %v66 = vld [vmem:[%s1] sm:$0xff]
    %v67 = vld [vmem:[%s1 + $0x8] sm:$0xff]
    %v68 = vld [vmem:[%s1 + $0x10] sm:$0xff]
    %v69 = vld [vmem:[%s1 + $0x18] sm:$0xff]
    %v70 = vld [vmem:[%s1 + $0x20] sm:$0xff]
    %v71 = vld [vmem:[%s1 + $0x28] sm:$0xff]
    %v72 = vld [vmem:[%s1 + $0x30] sm:$0xff]
    %v73 = vld [vmem:[%s1 + $0x38] sm:$0xff]
    %v74 = vld [vmem:[#allocation6] sm:$0xf]
    %v76 = vperm.slane %v74, 0
    %v77 = vperm.slane %v74, 1
    %v78 = vperm.slane %v74, 2
    %v79 = vperm.slane %v74, 3
    %vm84 = vcmask 130048
    %v86 = vsel %vm84, %v58, 0
    %v89 = vsel %vm84, %v59, 0
    %v92 = vsel %vm84, %v60, 0
    %v95 = vsel %vm84, %v61, 0
    %v98 = vsel %vm84, %v62, 0
    %v101 = vsel %vm84, %v63, 0
    %v104 = vsel %vm84, %v64, 0
    %v107 = vsel %vm84, %v65, 0
    %109 = vmatpush.msra.mxu0 0.0
    %110 = vmatpush.msra.mxu0 0.0
    %111 = vmatpush.msra.mxu0 0.0
    %112 = vmatpush.msra.mxu0 0.0
    %113 = vmatpush.msra.mxu0 0.0
    %114 = vmatpush.msra.mxu0 0.0
    %115 = vmatpush.msra.mxu0 0.0
    %116 = vmatpush.msra.mxu0 0.0
    %117 = vmatpush.msra.mxu0 0.0
    %118 = vmatpush.msra.mxu0 0.0
    %119 = vmatpush.msra.mxu0 0.0
    %120 = vmatpush.msra.mxu0 0.0
    %121 = vmatpush.msra.mxu0 0.0
    %122 = vmatpush.msra.mxu0 0.0
    %123 = vmatpush.msra.mxu0 %v70
    %124 = vmatpush.msra.mxu0 %v66
    %125 = vmatmul.f32.gmra.mxu0 %v86
    %v126 = vpop.f32.mrf.mxu0
    %v127 = vadd.f32 %v76, %v126
    %128 = vmatmul.f32.gmra.mxu0 %v89
    %v129 = vpop.f32.mrf.mxu0
    %v130 = vadd.f32 %v76, %v129
    %131 = vmatmul.f32.gmra.mxu0 %v92
    %v132 = vpop.f32.mrf.mxu0
    %v133 = vadd.f32 %v76, %v132
    %134 = vmatmul.f32.gmra.mxu0 %v95
    %v135 = vpop.f32.mrf.mxu0
    %v136 = vadd.f32 %v76, %v135
    %137 = vmatmul.f32.gmra.mxu0 %v98
    %v138 = vpop.f32.mrf.mxu0
    %v139 = vadd.f32 %v76, %v138
    %140 = vmatmul.f32.gmra.mxu0 %v101
    %v141 = vpop.f32.mrf.mxu0
    %v142 = vadd.f32 %v76, %v141
    %143 = vmatmul.f32.gmra.mxu0 %v104
    %v144 = vpop.f32.mrf.mxu0
    %v145 = vadd.f32 %v76, %v144
    %146 = vmatmul.f32.gmra.mxu0 %v107
    %v147 = vpop.f32.mrf.mxu0
    %v148 = vadd.f32 %v76, %v147
    %149 = vdwg.mxu0
    %150 = vmatpush.msra.mxu0 0.0
    %151 = vmatpush.msra.mxu0 0.0
    %152 = vmatpush.msra.mxu0 0.0
    %153 = vmatpush.msra.mxu0 0.0
    %154 = vmatpush.msra.mxu0 0.0
    %155 = vmatpush.msra.mxu0 0.0
    %156 = vmatpush.msra.mxu0 0.0
    %157 = vmatpush.msra.mxu0 0.0
    %158 = vmatpush.msra.mxu0 0.0
    %159 = vmatpush.msra.mxu0 0.0
    %160 = vmatpush.msra.mxu0 0.0
    %161 = vmatpush.msra.mxu0 0.0
    %162 = vmatpush.msra.mxu0 0.0
    %163 = vmatpush.msra.mxu0 0.0
    %164 = vmatpush.msra.mxu0 %v71
    %165 = vmatpush.msra.mxu0 %v67
    %166 = vmatmul.f32.gmra.mxu0 %v86
    %v167 = vpop.f32.mrf.mxu0
    %v168 = vadd.f32 %v77, %v167
    %169 = vmatmul.f32.gmra.mxu0 %v89
    %v170 = vpop.f32.mrf.mxu0
    %v171 = vadd.f32 %v77, %v170
    %172 = vmatmul.f32.gmra.mxu0 %v92
    %v173 = vpop.f32.mrf.mxu0
    %v174 = vadd.f32 %v77, %v173
    %175 = vmatmul.f32.gmra.mxu0 %v95
    %v176 = vpop.f32.mrf.mxu0
    %v177 = vadd.f32 %v77, %v176
    %178 = vmatmul.f32.gmra.mxu0 %v98
    %v179 = vpop.f32.mrf.mxu0
    %v180 = vadd.f32 %v77, %v179
    %181 = vmatmul.f32.gmra.mxu0 %v101
    %v182 = vpop.f32.mrf.mxu0
    %v183 = vadd.f32 %v77, %v182
    %184 = vmatmul.f32.gmra.mxu0 %v104
    %v185 = vpop.f32.mrf.mxu0
    %v186 = vadd.f32 %v77, %v185
    %187 = vmatmul.f32.gmra.mxu0 %v107
    %v188 = vpop.f32.mrf.mxu0
    %v189 = vadd.f32 %v77, %v188
    %190 = vdwg.mxu0
    %191 = vmatpush.msra.mxu0 0.0
    %192 = vmatpush.msra.mxu0 0.0
    %193 = vmatpush.msra.mxu0 0.0
    %194 = vmatpush.msra.mxu0 0.0
    %195 = vmatpush.msra.mxu0 0.0
    %196 = vmatpush.msra.mxu0 0.0
    %197 = vmatpush.msra.mxu0 0.0
    %198 = vmatpush.msra.mxu0 0.0
    %199 = vmatpush.msra.mxu0 0.0
    %200 = vmatpush.msra.mxu0 0.0
    %201 = vmatpush.msra.mxu0 0.0
    %202 = vmatpush.msra.mxu0 0.0
    %203 = vmatpush.msra.mxu0 0.0
    %204 = vmatpush.msra.mxu0 0.0
    %205 = vmatpush.msra.mxu0 %v72
    %206 = vmatpush.msra.mxu0 %v68
    %207 = vmatmul.f32.gmra.mxu0 %v86
    %v208 = vpop.f32.mrf.mxu0
    %v209 = vadd.f32 %v78, %v208
    %210 = vmatmul.f32.gmra.mxu0 %v89
    %v211 = vpop.f32.mrf.mxu0
    %v212 = vadd.f32 %v78, %v211
    %213 = vmatmul.f32.gmra.mxu0 %v92
    %v214 = vpop.f32.mrf.mxu0
    %v215 = vadd.f32 %v78, %v214
    %216 = vmatmul.f32.gmra.mxu0 %v95
    %v217 = vpop.f32.mrf.mxu0
    %v218 = vadd.f32 %v78, %v217
    %219 = vmatmul.f32.gmra.mxu0 %v98
    %v220 = vpop.f32.mrf.mxu0
    %v221 = vadd.f32 %v78, %v220
    %222 = vmatmul.f32.gmra.mxu0 %v101
    %v223 = vpop.f32.mrf.mxu0
    %v224 = vadd.f32 %v78, %v223
    %225 = vmatmul.f32.gmra.mxu0 %v104
    %v226 = vpop.f32.mrf.mxu0
    %v227 = vadd.f32 %v78, %v226
    %228 = vmatmul.f32.gmra.mxu0 %v107
    %v229 = vpop.f32.mrf.mxu0
    %v230 = vadd.f32 %v78, %v229
    %231 = vdwg.mxu0
    %232 = vmatpush.msra.mxu0 0.0
    %233 = vmatpush.msra.mxu0 0.0
    %234 = vmatpush.msra.mxu0 0.0
    %235 = vmatpush.msra.mxu0 0.0
    %236 = vmatpush.msra.mxu0 0.0
    %237 = vmatpush.msra.mxu0 0.0
    %238 = vmatpush.msra.mxu0 0.0
    %239 = vmatpush.msra.mxu0 0.0
    %240 = vmatpush.msra.mxu0 0.0
    %241 = vmatpush.msra.mxu0 0.0
    %242 = vmatpush.msra.mxu0 0.0
    %243 = vmatpush.msra.mxu0 0.0
    %244 = vmatpush.msra.mxu0 0.0
    %245 = vmatpush.msra.mxu0 0.0
    %246 = vmatpush.msra.mxu0 %v73
    %247 = vmatpush.msra.mxu0 %v69
    %248 = vmatmul.f32.gmra.mxu0 %v86
    %v249 = vpop.f32.mrf.mxu0
    %v250 = vadd.f32 %v79, %v249
    %251 = vmatmul.f32.gmra.mxu0 %v89
    %v252 = vpop.f32.mrf.mxu0
    %v253 = vadd.f32 %v79, %v252
    %254 = vmatmul.f32.gmra.mxu0 %v92
    %v255 = vpop.f32.mrf.mxu0
    %v256 = vadd.f32 %v79, %v255
    %257 = vmatmul.f32.gmra.mxu0 %v95
    %v258 = vpop.f32.mrf.mxu0
    %v259 = vadd.f32 %v79, %v258
    %260 = vmatmul.f32.gmra.mxu0 %v98
    %v261 = vpop.f32.mrf.mxu0
    %v262 = vadd.f32 %v79, %v261
    %263 = vmatmul.f32.gmra.mxu0 %v101
    %v264 = vpop.f32.mrf.mxu0
    %v265 = vadd.f32 %v79, %v264
    %266 = vmatmul.f32.gmra.mxu0 %v104
    %v267 = vpop.f32.mrf.mxu0
    %v268 = vadd.f32 %v79, %v267
    %269 = vmatmul.f32.gmra.mxu0 %v107
    %v270 = vpop.f32.mrf.mxu0
    %v271 = vadd.f32 %v79, %v270
    %272 = vdwg.mxu0
    %273 = vst [vmem:[#allocation2] sm:$0xff] %v127
    %274 = vst [vmem:[#allocation2 + $0x8] sm:$0xff] %v168
    %275 = vst [vmem:[#allocation2 + $0x10] sm:$0xff] %v209
    %276 = vst [vmem:[#allocation2 + $0x18] sm:$0xff] %v250
    %277 = vst [vmem:[#allocation2 + $0x20] sm:$0xff] %v130
    %278 = vst [vmem:[#allocation2 + $0x28] sm:$0xff] %v171
    %279 = vst [vmem:[#allocation2 + $0x30] sm:$0xff] %v212
    %280 = vst [vmem:[#allocation2 + $0x38] sm:$0xff] %v253
    %281 = vst [vmem:[#allocation2 + $0x40] sm:$0xff] %v133
    %282 = vst [vmem:[#allocation2 + $0x48] sm:$0xff] %v174
    %283 = vst [vmem:[#allocation2 + $0x50] sm:$0xff] %v215
    %284 = vst [vmem:[#allocation2 + $0x58] sm:$0xff] %v256
    %285 = vst [vmem:[#allocation2 + $0x60] sm:$0xff] %v136
    %286 = vst [vmem:[#allocation2 + $0x68] sm:$0xff] %v177
    %287 = vst [vmem:[#allocation2 + $0x70] sm:$0xff] %v218
    %288 = vst [vmem:[#allocation2 + $0x78] sm:$0xff] %v259
    %289 = vst [vmem:[#allocation2 + $0x80] sm:$0xff] %v139
    %290 = vst [vmem:[#allocation2 + $0x88] sm:$0xff] %v180
    %291 = vst [vmem:[#allocation2 + $0x90] sm:$0xff] %v221
    %292 = vst [vmem:[#allocation2 + $0x98] sm:$0xff] %v262
    %293 = vst [vmem:[#allocation2 + $0xa0] sm:$0xff] %v142
    %294 = vst [vmem:[#allocation2 + $0xa8] sm:$0xff] %v183
    %295 = vst [vmem:[#allocation2 + $0xb0] sm:$0xff] %v224
    %296 = vst [vmem:[#allocation2 + $0xb8] sm:$0xff] %v265
    %297 = vst [vmem:[#allocation2 + $0xc0] sm:$0xff] %v145
    %298 = vst [vmem:[#allocation2 + $0xc8] sm:$0xff] %v186
    %299 = vst [vmem:[#allocation2 + $0xd0] sm:$0xff] %v227
    %300 = vst [vmem:[#allocation2 + $0xd8] sm:$0xff] %v268
    %301 = vst [vmem:[#allocation2 + $0xe0] sm:$0xff] %v148
    %302 = vst [vmem:[#allocation2 + $0xe8] sm:$0xff] %v189
    %303 = vst [vmem:[#allocation2 + $0xf0] sm:$0xff] %v230
    %304 = vst [vmem:[#allocation2 + $0xf8] sm:$0xff] %v271
    %v305 = vld [vmem:[%s4] sm:$0xff]
    %v306 = vld [vmem:[%s5] sm:$0xff]
    %s307 = smul.u32 0, 4
    %s308 = smul.addr %s307, 8
    %s309 = scalar_lea.vmem [#allocation2], %s308
    %v310 = vld [vmem:[%s309] sm:$0xff]
    %v311 = vld [vmem:[%s309 + $0x8] sm:$0xff]
    %v312 = vld [vmem:[%s309 + $0x10] sm:$0xff]
    %v313 = vld [vmem:[%s309 + $0x18] sm:$0xff]
    %v314 = vld [vmem:[#allocation3] sm:$0xff]
    %v315 = vld [vmem:[#allocation3 + $0x8] sm:$0xff]
    %v316 = vld [vmem:[#allocation3 + $0x10] sm:$0xff]
    %v317 = vld [vmem:[#allocation3 + $0x18] sm:$0xff]
    %v318 = vld [vmem:[#allocation3 + $0x20] sm:$0xff]
    %v319 = vld [vmem:[#allocation3 + $0x28] sm:$0xff]
    %v320 = vld [vmem:[#allocation3 + $0x30] sm:$0xff]
    %v321 = vld [vmem:[#allocation3 + $0x38] sm:$0xff]
    %v322 = vld [vmem:[#allocation3 + $0x40] sm:$0xff]
    %v323 = vld [vmem:[#allocation3 + $0x48] sm:$0xff]
    %v324 = vld [vmem:[#allocation3 + $0x50] sm:$0xff]
    %v325 = vld [vmem:[#allocation3 + $0x58] sm:$0xff]
    %v326 = vld [vmem:[#allocation3 + $0x60] sm:$0xff]
    %v327 = vld [vmem:[#allocation3 + $0x68] sm:$0xff]
    %v328 = vld [vmem:[#allocation3 + $0x70] sm:$0xff]
    %v329 = vld [vmem:[#allocation3 + $0x78] sm:$0xff]
    %v330 = vld [vmem:[#allocation3 + $0x80] sm:$0xff]
    %v331 = vld [vmem:[#allocation3 + $0x88] sm:$0xff]
    %v332 = vld [vmem:[#allocation3 + $0x90] sm:$0xff]
    %v333 = vld [vmem:[#allocation3 + $0x98] sm:$0xff]
    %v334 = vld [vmem:[#allocation3 + $0xa0] sm:$0xff]
    %v335 = vld [vmem:[#allocation3 + $0xa8] sm:$0xff]
    %v336 = vld [vmem:[#allocation3 + $0xb0] sm:$0xff]
    %v337 = vld [vmem:[#allocation3 + $0xb8] sm:$0xff]
    %v338 = vld [vmem:[#allocation3 + $0xc0] sm:$0xff]
    %v339 = vld [vmem:[#allocation3 + $0xc8] sm:$0xff]
    %v340 = vld [vmem:[#allocation3 + $0xd0] sm:$0xff]
    %v341 = vld [vmem:[#allocation3 + $0xd8] sm:$0xff]
    %v342 = vld [vmem:[#allocation3 + $0xe0] sm:$0xff]
    %v343 = vld [vmem:[#allocation3 + $0xe8] sm:$0xff]
    %v344 = vld [vmem:[#allocation3 + $0xf0] sm:$0xff]
    %v345 = vld [vmem:[#allocation3 + $0xf8] sm:$0xff]
    %v346 = vld [vmem:[#allocation3 + $0x100] sm:$0xff]
    %v347 = vld [vmem:[#allocation3 + $0x108] sm:$0xff]
    %v348 = vld [vmem:[#allocation3 + $0x110] sm:$0xff]
    %v349 = vld [vmem:[#allocation3 + $0x118] sm:$0xff]
    %v350 = vld [vmem:[#allocation3 + $0x120] sm:$0xff]
    %v351 = vld [vmem:[#allocation3 + $0x128] sm:$0xff]
    %v352 = vld [vmem:[#allocation3 + $0x130] sm:$0xff]
    %v353 = vld [vmem:[#allocation3 + $0x138] sm:$0xff]
    %v354 = vld [vmem:[#allocation3 + $0x140] sm:$0xff]
    %v355 = vld [vmem:[#allocation3 + $0x148] sm:$0xff]
    %v356 = vld [vmem:[#allocation3 + $0x150] sm:$0xff]
    %v357 = vld [vmem:[#allocation3 + $0x158] sm:$0xff]
    %v358 = vld [vmem:[#allocation3 + $0x160] sm:$0xff]
    %v359 = vld [vmem:[#allocation3 + $0x168] sm:$0xff]
    %v360 = vld [vmem:[#allocation3 + $0x170] sm:$0xff]
    %v361 = vld [vmem:[#allocation3 + $0x178] sm:$0xff]
    %v362 = vld [vmem:[#allocation3 + $0x180] sm:$0xff]
    %v363 = vld [vmem:[#allocation3 + $0x188] sm:$0xff]
    %v364 = vld [vmem:[#allocation3 + $0x190] sm:$0xff]
    %v365 = vld [vmem:[#allocation3 + $0x198] sm:$0xff]
    %v366 = vld [vmem:[#allocation3 + $0x1a0] sm:$0xff]
    %v367 = vld [vmem:[#allocation3 + $0x1a8] sm:$0xff]
    %v368 = vld [vmem:[#allocation3 + $0x1b0] sm:$0xff]
    %v369 = vld [vmem:[#allocation3 + $0x1b8] sm:$0xff]
    %v370 = vld [vmem:[#allocation3 + $0x1c0] sm:$0xff]
    %v371 = vld [vmem:[#allocation3 + $0x1c8] sm:$0xff]
    %v372 = vld [vmem:[#allocation3 + $0x1d0] sm:$0xff]
    %v373 = vld [vmem:[#allocation3 + $0x1d8] sm:$0xff]
    %v374 = vld [vmem:[#allocation3 + $0x1e0] sm:$0xff]
    %v375 = vld [vmem:[#allocation3 + $0x1e8] sm:$0xff]
    %v376 = vld [vmem:[#allocation3 + $0x1f0] sm:$0xff]
    %v377 = vld [vmem:[#allocation3 + $0x1f8] sm:$0xff]
    %378 = vmatpush.msra.mxu0 %v374
    %379 = vmatpush.msra.mxu0 %v370
    %380 = vmatpush.msra.mxu0 %v366
    %381 = vmatpush.msra.mxu0 %v362
    %382 = vmatpush.msra.mxu0 %v358
    %383 = vmatpush.msra.mxu0 %v354
    %384 = vmatpush.msra.mxu0 %v350
    %385 = vmatpush.msra.mxu0 %v346
    %386 = vmatpush.msra.mxu0 %v342
    %387 = vmatpush.msra.mxu0 %v338
    %388 = vmatpush.msra.mxu0 %v334
    %389 = vmatpush.msra.mxu0 %v330
    %390 = vmatpush.msra.mxu0 %v326
    %391 = vmatpush.msra.mxu0 %v322
    %392 = vmatpush.msra.mxu0 %v318
    %393 = vmatpush.msra.mxu0 %v314
    %394 = vmatmul.f32.gmra.mxu0 %v305
    %v395 = vpop.f32.mrf.mxu0
    %v396 = vadd.f32 0.0, %v395
    %397 = vdwg.mxu0
    %398 = vmatpush.msra.mxu0 %v375
    %399 = vmatpush.msra.mxu0 %v371
    %400 = vmatpush.msra.mxu0 %v367
    %401 = vmatpush.msra.mxu0 %v363
    %402 = vmatpush.msra.mxu0 %v359
    %403 = vmatpush.msra.mxu0 %v355
    %404 = vmatpush.msra.mxu0 %v351
    %405 = vmatpush.msra.mxu0 %v347
    %406 = vmatpush.msra.mxu0 %v343
    %407 = vmatpush.msra.mxu0 %v339
    %408 = vmatpush.msra.mxu0 %v335
    %409 = vmatpush.msra.mxu0 %v331
    %410 = vmatpush.msra.mxu0 %v327
    %411 = vmatpush.msra.mxu0 %v323
    %412 = vmatpush.msra.mxu0 %v319
    %413 = vmatpush.msra.mxu0 %v315
    %414 = vmatmul.f32.gmra.mxu0 %v305
    %v415 = vpop.f32.mrf.mxu0
    %v416 = vadd.f32 0.0, %v415
    %417 = vdwg.mxu0
    %418 = vmatpush.msra.mxu0 %v376
    %419 = vmatpush.msra.mxu0 %v372
    %420 = vmatpush.msra.mxu0 %v368
    %421 = vmatpush.msra.mxu0 %v364
    %422 = vmatpush.msra.mxu0 %v360
    %423 = vmatpush.msra.mxu0 %v356
    %424 = vmatpush.msra.mxu0 %v352
    %425 = vmatpush.msra.mxu0 %v348
    %426 = vmatpush.msra.mxu0 %v344
    %427 = vmatpush.msra.mxu0 %v340
    %428 = vmatpush.msra.mxu0 %v336
    %429 = vmatpush.msra.mxu0 %v332
    %430 = vmatpush.msra.mxu0 %v328
    %431 = vmatpush.msra.mxu0 %v324
    %432 = vmatpush.msra.mxu0 %v320
    %433 = vmatpush.msra.mxu0 %v316
    %434 = vmatmul.f32.gmra.mxu0 %v305
    %v435 = vpop.f32.mrf.mxu0
    %v436 = vadd.f32 0.0, %v435
    %437 = vdwg.mxu0
    %438 = vmatpush.msra.mxu0 %v377
    %439 = vmatpush.msra.mxu0 %v373
    %440 = vmatpush.msra.mxu0 %v369
    %441 = vmatpush.msra.mxu0 %v365
    %442 = vmatpush.msra.mxu0 %v361
    %443 = vmatpush.msra.mxu0 %v357
    %444 = vmatpush.msra.mxu0 %v353
    %445 = vmatpush.msra.mxu0 %v349
    %446 = vmatpush.msra.mxu0 %v345
    %447 = vmatpush.msra.mxu0 %v341
    %448 = vmatpush.msra.mxu0 %v337
    %449 = vmatpush.msra.mxu0 %v333
    %450 = vmatpush.msra.mxu0 %v329
    %451 = vmatpush.msra.mxu0 %v325
    %452 = vmatpush.msra.mxu0 %v321
    %453 = vmatpush.msra.mxu0 %v317
    %454 = vmatmul.f32.gmra.mxu0 %v305
    %v455 = vpop.f32.mrf.mxu0
    %v456 = vadd.f32 0.0, %v455
    %457 = vdwg.mxu0
    %v458 = vadd.f32 %v310, %v396
    %v459 = vadd.f32 %v311, %v416
    %v460 = vadd.f32 %v312, %v436
    %v461 = vadd.f32 %v313, %v456
    %v462 = vxor.u32 %v458, 2147483648
    %v463 = vxor.u32 %v459, 2147483648
    %v464 = vxor.u32 %v461, 2147483648
    %v465 = vmul.f32 %v462, 1.442695
    %v466 = vpow.pop %v465
    %v467 = vmul.f32 %v463, 1.442695
    %v468 = vpow.pop %v467
    %v469 = vmul.f32 %v464, 1.442695
    %v470 = vpow.pop %v469
    %v471 = vadd.f32 %v466, 1.0
    %v472 = vadd.f32 %v468, 1.0
    %v473 = vadd.f32 %v470, 1.0
    %v474 = vrcp.pop %v471
    %v475 = vmul.f32 %v471, %v474
    %v476 = vsub.f32 1.0, %v475
    %v477 = vmul.f32 %v474, %v476
    %v478 = vadd.f32 %v474, %v477
    %vm479 = vweird.f32 %v471
    %vm480 = vweird.f32 %v474
    %vm481 = vmor %vm479, %vm480
    %v482 = vsel %vm481, %v474, %v478
    %v483 = vand.u32 2147483647, %v471
    %vm484 = vcmp.eq.f32.partialorder %v483, 8.507059e+37
    %v485 = vand.u32 %v471, 2147483648
    %v486 = vor.u32 1.1754944e-38, %v485
    %v487 = vsel %vm484, %v486, %v482
    %v488 = vmul.f32 1.0, %v487
    %v489 = vrcp.pop %v472
    %v490 = vmul.f32 %v472, %v489
    %v491 = vsub.f32 1.0, %v490
    %v492 = vmul.f32 %v489, %v491
    %v493 = vadd.f32 %v489, %v492
    %vm494 = vweird.f32 %v472
    %vm495 = vweird.f32 %v489
    %vm496 = vmor %vm494, %vm495
    %v497 = vsel %vm496, %v489, %v493
    %v498 = vand.u32 2147483647, %v472
    %vm499 = vcmp.eq.f32.partialorder %v498, 8.507059e+37
    %v500 = vand.u32 %v472, 2147483648
    %v501 = vor.u32 1.1754944e-38, %v500
    %v502 = vsel %vm499, %v501, %v497
    %v503 = vmul.f32 1.0, %v502
    %v504 = vrcp.pop %v473
    %v505 = vmul.f32 %v473, %v504
    %v506 = vsub.f32 1.0, %v505
    %v507 = vmul.f32 %v504, %v506
    %v508 = vadd.f32 %v504, %v507
    %vm509 = vweird.f32 %v473
    %vm510 = vweird.f32 %v504
    %vm511 = vmor %vm509, %vm510
    %v512 = vsel %vm511, %v504, %v508
    %v513 = vand.u32 2147483647, %v473
    %vm514 = vcmp.eq.f32.partialorder %v513, 8.507059e+37
    %v515 = vand.u32 %v473, 2147483648
    %v516 = vor.u32 1.1754944e-38, %v515
    %v517 = vsel %vm514, %v516, %v512
    %v518 = vmul.f32 1.0, %v517
    %v519 = vtanh.pop %v460
    %v520 = vmul.f32 %v503, %v306
    %v521 = vmul.f32 %v488, %v519
    %v522 = vadd.f32 %v520, %v521
    %v523 = vtanh.pop %v522
    %v524 = vmul.f32 %v518, %v523
    %525 = vst [vmem:[#allocation8] sm:$0xff] %v524
    %s526 = smul.u32 1, 4
    %s527 = smul.addr %s526, 8
    %s528 = scalar_lea.vmem [#allocation2], %s527
    %v529 = vld [vmem:[%s528] sm:$0xff]
    %v530 = vld [vmem:[%s528 + $0x8] sm:$0xff]
    %v531 = vld [vmem:[%s528 + $0x10] sm:$0xff]
    %v532 = vld [vmem:[%s528 + $0x18] sm:$0xff]
    %v533 = vld [vmem:[#allocation3] sm:$0xff]
    %v534 = vld [vmem:[#allocation3 + $0x8] sm:$0xff]
    %v535 = vld [vmem:[#allocation3 + $0x10] sm:$0xff]
    %v536 = vld [vmem:[#allocation3 + $0x18] sm:$0xff]
    %v537 = vld [vmem:[#allocation3 + $0x20] sm:$0xff]
    %v538 = vld [vmem:[#allocation3 + $0x28] sm:$0xff]
    %v539 = vld [vmem:[#allocation3 + $0x30] sm:$0xff]
    %v540 = vld [vmem:[#allocation3 + $0x38] sm:$0xff]
    %v541 = vld [vmem:[#allocation3 + $0x40] sm:$0xff]
    %v542 = vld [vmem:[#allocation3 + $0x48] sm:$0xff]
    %v543 = vld [vmem:[#allocation3 + $0x50] sm:$0xff]
    %v544 = vld [vmem:[#allocation3 + $0x58] sm:$0xff]
    %v545 = vld [vmem:[#allocation3 + $0x60] sm:$0xff]
    %v546 = vld [vmem:[#allocation3 + $0x68] sm:$0xff]
    %v547 = vld [vmem:[#allocation3 + $0x70] sm:$0xff]
    %v548 = vld [vmem:[#allocation3 + $0x78] sm:$0xff]
    %v549 = vld [vmem:[#allocation3 + $0x80] sm:$0xff]
    %v550 = vld [vmem:[#allocation3 + $0x88] sm:$0xff]
    %v551 = vld [vmem:[#allocation3 + $0x90] sm:$0xff]
    %v552 = vld [vmem:[#allocation3 + $0x98] sm:$0xff]
    %v553 = vld [vmem:[#allocation3 + $0xa0] sm:$0xff]
    %v554 = vld [vmem:[#allocation3 + $0xa8] sm:$0xff]
    %v555 = vld [vmem:[#allocation3 + $0xb0] sm:$0xff]
    %v556 = vld [vmem:[#allocation3 + $0xb8] sm:$0xff]
    %v557 = vld [vmem:[#allocation3 + $0xc0] sm:$0xff]
    %v558 = vld [vmem:[#allocation3 + $0xc8] sm:$0xff]
    %v559 = vld [vmem:[#allocation3 + $0xd0] sm:$0xff]
    %v560 = vld [vmem:[#allocation3 + $0xd8] sm:$0xff]
    %v561 = vld [vmem:[#allocation3 + $0xe0] sm:$0xff]
    %v562 = vld [vmem:[#allocation3 + $0xe8] sm:$0xff]
    %v563 = vld [vmem:[#allocation3 + $0xf0] sm:$0xff]
    %v564 = vld [vmem:[#allocation3 + $0xf8] sm:$0xff]
    %v565 = vld [vmem:[#allocation3 + $0x100] sm:$0xff]
    %v566 = vld [vmem:[#allocation3 + $0x108] sm:$0xff]
    %v567 = vld [vmem:[#allocation3 + $0x110] sm:$0xff]
    %v568 = vld [vmem:[#allocation3 + $0x118] sm:$0xff]
    %v569 = vld [vmem:[#allocation3 + $0x120] sm:$0xff]
    %v570 = vld [vmem:[#allocation3 + $0x128] sm:$0xff]
    %v571 = vld [vmem:[#allocation3 + $0x130] sm:$0xff]
    %v572 = vld [vmem:[#allocation3 + $0x138] sm:$0xff]
    %v573 = vld [vmem:[#allocation3 + $0x140] sm:$0xff]
    %v574 = vld [vmem:[#allocation3 + $0x148] sm:$0xff]
    %v575 = vld [vmem:[#allocation3 + $0x150] sm:$0xff]
    %v576 = vld [vmem:[#allocation3 + $0x158] sm:$0xff]
    %v577 = vld [vmem:[#allocation3 + $0x160] sm:$0xff]
    %v578 = vld [vmem:[#allocation3 + $0x168] sm:$0xff]
    %v579 = vld [vmem:[#allocation3 + $0x170] sm:$0xff]
    %v580 = vld [vmem:[#allocation3 + $0x178] sm:$0xff]
    %v581 = vld [vmem:[#allocation3 + $0x180] sm:$0xff]
    %v582 = vld [vmem:[#allocation3 + $0x188] sm:$0xff]
    %v583 = vld [vmem:[#allocation3 + $0x190] sm:$0xff]
    %v584 = vld [vmem:[#allocation3 + $0x198] sm:$0xff]
    %v585 = vld [vmem:[#allocation3 + $0x1a0] sm:$0xff]
    %v586 = vld [vmem:[#allocation3 + $0x1a8] sm:$0xff]
    %v587 = vld [vmem:[#allocation3 + $0x1b0] sm:$0xff]
    %v588 = vld [vmem:[#allocation3 + $0x1b8] sm:$0xff]
    %v589 = vld [vmem:[#allocation3 + $0x1c0] sm:$0xff]
    %v590 = vld [vmem:[#allocation3 + $0x1c8] sm:$0xff]
    %v591 = vld [vmem:[#allocation3 + $0x1d0] sm:$0xff]
    %v592 = vld [vmem:[#allocation3 + $0x1d8] sm:$0xff]
    %v593 = vld [vmem:[#allocation3 + $0x1e0] sm:$0xff]
    %v594 = vld [vmem:[#allocation3 + $0x1e8] sm:$0xff]
    %v595 = vld [vmem:[#allocation3 + $0x1f0] sm:$0xff]
    %v596 = vld [vmem:[#allocation3 + $0x1f8] sm:$0xff]
    %597 = vmatpush.msra.mxu0 %v593
    %598 = vmatpush.msra.mxu0 %v589
    %599 = vmatpush.msra.mxu0 %v585
    %600 = vmatpush.msra.mxu0 %v581
    %601 = vmatpush.msra.mxu0 %v577
    %602 = vmatpush.msra.mxu0 %v573
    %603 = vmatpush.msra.mxu0 %v569
    %604 = vmatpush.msra.mxu0 %v565
    %605 = vmatpush.msra.mxu0 %v561
    %606 = vmatpush.msra.mxu0 %v557
    %607 = vmatpush.msra.mxu0 %v553
    %608 = vmatpush.msra.mxu0 %v549
    %609 = vmatpush.msra.mxu0 %v545
    %610 = vmatpush.msra.mxu0 %v541
    %611 = vmatpush.msra.mxu0 %v537
    %612 = vmatpush.msra.mxu0 %v533
    %613 = vmatmul.f32.gmra.mxu0 %v524
    %v614 = vpop.f32.mrf.mxu0
    %v615 = vadd.f32 0.0, %v614
    %616 = vdwg.mxu0
    %617 = vmatpush.msra.mxu0 %v594
    %618 = vmatpush.msra.mxu0 %v590
    %619 = vmatpush.msra.mxu0 %v586
    %620 = vmatpush.msra.mxu0 %v582
    %621 = vmatpush.msra.mxu0 %v578
    %622 = vmatpush.msra.mxu0 %v574
    %623 = vmatpush.msra.mxu0 %v570
    %624 = vmatpush.msra.mxu0 %v566
    %625 = vmatpush.msra.mxu0 %v562
    %626 = vmatpush.msra.mxu0 %v558
    %627 = vmatpush.msra.mxu0 %v554
    %628 = vmatpush.msra.mxu0 %v550
    %629 = vmatpush.msra.mxu0 %v546
    %630 = vmatpush.msra.mxu0 %v542
    %631 = vmatpush.msra.mxu0 %v538
    %632 = vmatpush.msra.mxu0 %v534
    %633 = vmatmul.f32.gmra.mxu0 %v524
    %v634 = vpop.f32.mrf.mxu0
    %v635 = vadd.f32 0.0, %v634
    %636 = vdwg.mxu0
    %637 = vmatpush.msra.mxu0 %v595
    %638 = vmatpush.msra.mxu0 %v591
    %639 = vmatpush.msra.mxu0 %v587
    %640 = vmatpush.msra.mxu0 %v583
    %641 = vmatpush.msra.mxu0 %v579
    %642 = vmatpush.msra.mxu0 %v575
    %643 = vmatpush.msra.mxu0 %v571
    %644 = vmatpush.msra.mxu0 %v567
    %645 = vmatpush.msra.mxu0 %v563
    %646 = vmatpush.msra.mxu0 %v559
    %647 = vmatpush.msra.mxu0 %v555
    %648 = vmatpush.msra.mxu0 %v551
    %649 = vmatpush.msra.mxu0 %v547
    %650 = vmatpush.msra.mxu0 %v543
    %651 = vmatpush.msra.mxu0 %v539
    %652 = vmatpush.msra.mxu0 %v535
    %653 = vmatmul.f32.gmra.mxu0 %v524
    %v654 = vpop.f32.mrf.mxu0
    %v655 = vadd.f32 0.0, %v654
    %656 = vdwg.mxu0
    %657 = vmatpush.msra.mxu0 %v596
    %658 = vmatpush.msra.mxu0 %v592
    %659 = vmatpush.msra.mxu0 %v588
    %660 = vmatpush.msra.mxu0 %v584
    %661 = vmatpush.msra.mxu0 %v580
    %662 = vmatpush.msra.mxu0 %v576
    %663 = vmatpush.msra.mxu0 %v572
    %664 = vmatpush.msra.mxu0 %v568
    %665 = vmatpush.msra.mxu0 %v564
    %666 = vmatpush.msra.mxu0 %v560
    %667 = vmatpush.msra.mxu0 %v556
    %668 = vmatpush.msra.mxu0 %v552
    %669 = vmatpush.msra.mxu0 %v548
    %670 = vmatpush.msra.mxu0 %v544
    %671 = vmatpush.msra.mxu0 %v540
    %672 = vmatpush.msra.mxu0 %v536
    %673 = vmatmul.f32.gmra.mxu0 %v524
    %v674 = vpop.f32.mrf.mxu0
    %v675 = vadd.f32 0.0, %v674
    %676 = vdwg.mxu0
    %v677 = vadd.f32 %v529, %v615
    %v678 = vadd.f32 %v530, %v635
    %v679 = vadd.f32 %v531, %v655
    %v680 = vadd.f32 %v532, %v675
    %v681 = vxor.u32 %v677, 2147483648
    %v682 = vxor.u32 %v678, 2147483648
    %v683 = vxor.u32 %v680, 2147483648
    %v684 = vmul.f32 %v681, 1.442695
    %v685 = vpow.pop %v684
    %v686 = vmul.f32 %v682, 1.442695
    %v687 = vpow.pop %v686
    %v688 = vmul.f32 %v683, 1.442695
    %v689 = vpow.pop %v688
    %v690 = vadd.f32 %v685, 1.0
    %v691 = vadd.f32 %v687, 1.0
    %v692 = vadd.f32 %v689, 1.0
    %v693 = vrcp.pop %v690
    %v694 = vmul.f32 %v690, %v693
    %v695 = vsub.f32 1.0, %v694
    %v696 = vmul.f32 %v693, %v695
    %v697 = vadd.f32 %v693, %v696
    %vm698 = vweird.f32 %v690
    %vm699 = vweird.f32 %v693
    %vm700 = vmor %vm698, %vm699
    %v701 = vsel %vm700, %v693, %v697
    %v702 = vand.u32 2147483647, %v690
    %vm703 = vcmp.eq.f32.partialorder %v702, 8.507059e+37
    %v704 = vand.u32 %v690, 2147483648
    %v705 = vor.u32 1.1754944e-38, %v704
    %v706 = vsel %vm703, %v705, %v701
    %v707 = vmul.f32 1.0, %v706
    %v708 = vrcp.pop %v691
    %v709 = vmul.f32 %v691, %v708
    %v710 = vsub.f32 1.0, %v709
    %v711 = vmul.f32 %v708, %v710
    %v712 = vadd.f32 %v708, %v711
    %vm713 = vweird.f32 %v691
    %vm714 = vweird.f32 %v708
    %vm715 = vmor %vm713, %vm714
    %v716 = vsel %vm715, %v708, %v712
    %v717 = vand.u32 2147483647, %v691
    %vm718 = vcmp.eq.f32.partialorder %v717, 8.507059e+37
    %v719 = vand.u32 %v691, 2147483648
    %v720 = vor.u32 1.1754944e-38, %v719
    %v721 = vsel %vm718, %v720, %v716
    %v722 = vmul.f32 1.0, %v721
    %v723 = vrcp.pop %v692
    %v724 = vmul.f32 %v692, %v723
    %v725 = vsub.f32 1.0, %v724
    %v726 = vmul.f32 %v723, %v725
    %v727 = vadd.f32 %v723, %v726
    %vm728 = vweird.f32 %v692
    %vm729 = vweird.f32 %v723
    %vm730 = vmor %vm728, %vm729
    %v731 = vsel %vm730, %v723, %v727
    %v732 = vand.u32 2147483647, %v692
    %vm733 = vcmp.eq.f32.partialorder %v732, 8.507059e+37
    %v734 = vand.u32 %v692, 2147483648
    %v735 = vor.u32 1.1754944e-38, %v734
    %v736 = vsel %vm733, %v735, %v731
    %v737 = vmul.f32 1.0, %v736
    %v738 = vtanh.pop %v679
    %v739 = vmul.f32 %v722, %v522
    %v740 = vmul.f32 %v707, %v738
    %v741 = vadd.f32 %v739, %v740
    %v742 = vtanh.pop %v741
    %v743 = vmul.f32 %v737, %v742
    %s744 = scalar_lea.vmem [#allocation8], 8
    %745 = vst [vmem:[%s744] sm:$0xff] %v743
    %s746 = smul.u32 2, 4
    %s747 = smul.addr %s746, 8
    %s748 = scalar_lea.vmem [#allocation2], %s747
    %v749 = vld [vmem:[%s748] sm:$0xff]
    %v750 = vld [vmem:[%s748 + $0x8] sm:$0xff]
    %v751 = vld [vmem:[%s748 + $0x10] sm:$0xff]
    %v752 = vld [vmem:[%s748 + $0x18] sm:$0xff]
    %v753 = vld [vmem:[#allocation3] sm:$0xff]
    %v754 = vld [vmem:[#allocation3 + $0x8] sm:$0xff]
    %v755 = vld [vmem:[#allocation3 + $0x10] sm:$0xff]
    %v756 = vld [vmem:[#allocation3 + $0x18] sm:$0xff]
    %v757 = vld [vmem:[#allocation3 + $0x20] sm:$0xff]
    %v758 = vld [vmem:[#allocation3 + $0x28] sm:$0xff]
    %v759 = vld [vmem:[#allocation3 + $0x30] sm:$0xff]
    %v760 = vld [vmem:[#allocation3 + $0x38] sm:$0xff]
    %v761 = vld [vmem:[#allocation3 + $0x40] sm:$0xff]
    %v762 = vld [vmem:[#allocation3 + $0x48] sm:$0xff]
    %v763 = vld [vmem:[#allocation3 + $0x50] sm:$0xff]
    %v764 = vld [vmem:[#allocation3 + $0x58] sm:$0xff]
    %v765 = vld [vmem:[#allocation3 + $0x60] sm:$0xff]
    %v766 = vld [vmem:[#allocation3 + $0x68] sm:$0xff]
    %v767 = vld [vmem:[#allocation3 + $0x70] sm:$0xff]
    %v768 = vld [vmem:[#allocation3 + $0x78] sm:$0xff]
    %v769 = vld [vmem:[#allocation3 + $0x80] sm:$0xff]
    %v770 = vld [vmem:[#allocation3 + $0x88] sm:$0xff]
    %v771 = vld [vmem:[#allocation3 + $0x90] sm:$0xff]
    %v772 = vld [vmem:[#allocation3 + $0x98] sm:$0xff]
    %v773 = vld [vmem:[#allocation3 + $0xa0] sm:$0xff]
    %v774 = vld [vmem:[#allocation3 + $0xa8] sm:$0xff]
    %v775 = vld [vmem:[#allocation3 + $0xb0] sm:$0xff]
    %v776 = vld [vmem:[#allocation3 + $0xb8] sm:$0xff]
    %v777 = vld [vmem:[#allocation3 + $0xc0] sm:$0xff]
    %v778 = vld [vmem:[#allocation3 + $0xc8] sm:$0xff]
    %v779 = vld [vmem:[#allocation3 + $0xd0] sm:$0xff]
    %v780 = vld [vmem:[#allocation3 + $0xd8] sm:$0xff]
    %v781 = vld [vmem:[#allocation3 + $0xe0] sm:$0xff]
    %v782 = vld [vmem:[#allocation3 + $0xe8] sm:$0xff]
    %v783 = vld [vmem:[#allocation3 + $0xf0] sm:$0xff]
    %v784 = vld [vmem:[#allocation3 + $0xf8] sm:$0xff]
    %v785 = vld [vmem:[#allocation3 + $0x100] sm:$0xff]
    %v786 = vld [vmem:[#allocation3 + $0x108] sm:$0xff]
    %v787 = vld [vmem:[#allocation3 + $0x110] sm:$0xff]
    %v788 = vld [vmem:[#allocation3 + $0x118] sm:$0xff]
    %v789 = vld [vmem:[#allocation3 + $0x120] sm:$0xff]
    %v790 = vld [vmem:[#allocation3 + $0x128] sm:$0xff]
    %v791 = vld [vmem:[#allocation3 + $0x130] sm:$0xff]
    %v792 = vld [vmem:[#allocation3 + $0x138] sm:$0xff]
    %v793 = vld [vmem:[#allocation3 + $0x140] sm:$0xff]
    %v794 = vld [vmem:[#allocation3 + $0x148] sm:$0xff]
    %v795 = vld [vmem:[#allocation3 + $0x150] sm:$0xff]
    %v796 = vld [vmem:[#allocation3 + $0x158] sm:$0xff]
    %v797 = vld [vmem:[#allocation3 + $0x160] sm:$0xff]
    %v798 = vld [vmem:[#allocation3 + $0x168] sm:$0xff]
    %v799 = vld [vmem:[#allocation3 + $0x170] sm:$0xff]
    %v800 = vld [vmem:[#allocation3 + $0x178] sm:$0xff]
    %v801 = vld [vmem:[#allocation3 + $0x180] sm:$0xff]
    %v802 = vld [vmem:[#allocation3 + $0x188] sm:$0xff]
    %v803 = vld [vmem:[#allocation3 + $0x190] sm:$0xff]
    %v804 = vld [vmem:[#allocation3 + $0x198] sm:$0xff]
    %v805 = vld [vmem:[#allocation3 + $0x1a0] sm:$0xff]
    %v806 = vld [vmem:[#allocation3 + $0x1a8] sm:$0xff]
    %v807 = vld [vmem:[#allocation3 + $0x1b0] sm:$0xff]
    %v808 = vld [vmem:[#allocation3 + $0x1b8] sm:$0xff]
    %v809 = vld [vmem:[#allocation3 + $0x1c0] sm:$0xff]
    %v810 = vld [vmem:[#allocation3 + $0x1c8] sm:$0xff]
    %v811 = vld [vmem:[#allocation3 + $0x1d0] sm:$0xff]
    %v812 = vld [vmem:[#allocation3 + $0x1d8] sm:$0xff]
    %v813 = vld [vmem:[#allocation3 + $0x1e0] sm:$0xff]
    %v814 = vld [vmem:[#allocation3 + $0x1e8] sm:$0xff]
    %v815 = vld [vmem:[#allocation3 + $0x1f0] sm:$0xff]
    %v816 = vld [vmem:[#allocation3 + $0x1f8] sm:$0xff]
    %817 = vmatpush.msra.mxu0 %v813
    %818 = vmatpush.msra.mxu0 %v809
    %819 = vmatpush.msra.mxu0 %v805
    %820 = vmatpush.msra.mxu0 %v801
    %821 = vmatpush.msra.mxu0 %v797
    %822 = vmatpush.msra.mxu0 %v793
    %823 = vmatpush.msra.mxu0 %v789
    %824 = vmatpush.msra.mxu0 %v785
    %825 = vmatpush.msra.mxu0 %v781
    %826 = vmatpush.msra.mxu0 %v777
    %827 = vmatpush.msra.mxu0 %v773
    %828 = vmatpush.msra.mxu0 %v769
    %829 = vmatpush.msra.mxu0 %v765
    %830 = vmatpush.msra.mxu0 %v761
    %831 = vmatpush.msra.mxu0 %v757
    %832 = vmatpush.msra.mxu0 %v753
    %833 = vmatmul.f32.gmra.mxu0 %v743
    %v834 = vpop.f32.mrf.mxu0
    %v835 = vadd.f32 0.0, %v834
    %836 = vdwg.mxu0
    %837 = vmatpush.msra.mxu0 %v814
    %838 = vmatpush.msra.mxu0 %v810
    %839 = vmatpush.msra.mxu0 %v806
    %840 = vmatpush.msra.mxu0 %v802
    %841 = vmatpush.msra.mxu0 %v798
    %842 = vmatpush.msra.mxu0 %v794
    %843 = vmatpush.msra.mxu0 %v790
    %844 = vmatpush.msra.mxu0 %v786
    %845 = vmatpush.msra.mxu0 %v782
    %846 = vmatpush.msra.mxu0 %v778
    %847 = vmatpush.msra.mxu0 %v774
    %848 = vmatpush.msra.mxu0 %v770
    %849 = vmatpush.msra.mxu0 %v766
    %850 = vmatpush.msra.mxu0 %v762
    %851 = vmatpush.msra.mxu0 %v758
    %852 = vmatpush.msra.mxu0 %v754
    %853 = vmatmul.f32.gmra.mxu0 %v743
    %v854 = vpop.f32.mrf.mxu0
    %v855 = vadd.f32 0.0, %v854
    %856 = vdwg.mxu0
    %857 = vmatpush.msra.mxu0 %v815
    %858 = vmatpush.msra.mxu0 %v811
    %859 = vmatpush.msra.mxu0 %v807
    %860 = vmatpush.msra.mxu0 %v803
    %861 = vmatpush.msra.mxu0 %v799
    %862 = vmatpush.msra.mxu0 %v795
    %863 = vmatpush.msra.mxu0 %v791
    %864 = vmatpush.msra.mxu0 %v787
    %865 = vmatpush.msra.mxu0 %v783
    %866 = vmatpush.msra.mxu0 %v779
    %867 = vmatpush.msra.mxu0 %v775
    %868 = vmatpush.msra.mxu0 %v771
    %869 = vmatpush.msra.mxu0 %v767
    %870 = vmatpush.msra.mxu0 %v763
    %871 = vmatpush.msra.mxu0 %v759
    %872 = vmatpush.msra.mxu0 %v755
    %873 = vmatmul.f32.gmra.mxu0 %v743
    %v874 = vpop.f32.mrf.mxu0
    %v875 = vadd.f32 0.0, %v874
    %876 = vdwg.mxu0
    %877 = vmatpush.msra.mxu0 %v816
    %878 = vmatpush.msra.mxu0 %v812
    %879 = vmatpush.msra.mxu0 %v808
    %880 = vmatpush.msra.mxu0 %v804
    %881 = vmatpush.msra.mxu0 %v800
    %882 = vmatpush.msra.mxu0 %v796
    %883 = vmatpush.msra.mxu0 %v792
    %884 = vmatpush.msra.mxu0 %v788
    %885 = vmatpush.msra.mxu0 %v784
    %886 = vmatpush.msra.mxu0 %v780
    %887 = vmatpush.msra.mxu0 %v776
    %888 = vmatpush.msra.mxu0 %v772
    %889 = vmatpush.msra.mxu0 %v768
    %890 = vmatpush.msra.mxu0 %v764
    %891 = vmatpush.msra.mxu0 %v760
    %892 = vmatpush.msra.mxu0 %v756
    %893 = vmatmul.f32.gmra.mxu0 %v743
    %v894 = vpop.f32.mrf.mxu0
    %v895 = vadd.f32 0.0, %v894
    %896 = vdwg.mxu0
    %v897 = vadd.f32 %v749, %v835
    %v898 = vadd.f32 %v750, %v855
    %v899 = vadd.f32 %v751, %v875
    %v900 = vadd.f32 %v752, %v895
    %v901 = vxor.u32 %v897, 2147483648
    %v902 = vxor.u32 %v898, 2147483648
    %v903 = vxor.u32 %v900, 2147483648
    %v904 = vmul.f32 %v901, 1.442695
    %v905 = vpow.pop %v904
    %v906 = vmul.f32 %v902, 1.442695
    %v907 = vpow.pop %v906
    %v908 = vmul.f32 %v903, 1.442695
    %v909 = vpow.pop %v908
    %v910 = vadd.f32 %v905, 1.0
    %v911 = vadd.f32 %v907, 1.0
    %v912 = vadd.f32 %v909, 1.0
    %v913 = vrcp.pop %v910
    %v914 = vmul.f32 %v910, %v913
    %v915 = vsub.f32 1.0, %v914
    %v916 = vmul.f32 %v913, %v915
    %v917 = vadd.f32 %v913, %v916
    %vm918 = vweird.f32 %v910
    %vm919 = vweird.f32 %v913
    %vm920 = vmor %vm918, %vm919
    %v921 = vsel %vm920, %v913, %v917
    %v922 = vand.u32 2147483647, %v910
    %vm923 = vcmp.eq.f32.partialorder %v922, 8.507059e+37
    %v924 = vand.u32 %v910, 2147483648
    %v925 = vor.u32 1.1754944e-38, %v924
    %v926 = vsel %vm923, %v925, %v921
    %v927 = vmul.f32 1.0, %v926
    %v928 = vrcp.pop %v911
    %v929 = vmul.f32 %v911, %v928
    %v930 = vsub.f32 1.0, %v929
    %v931 = vmul.f32 %v928, %v930
    %v932 = vadd.f32 %v928, %v931
    %vm933 = vweird.f32 %v911
    %vm934 = vweird.f32 %v928
    %vm935 = vmor %vm933, %vm934
    %v936 = vsel %vm935, %v928, %v932
    %v937 = vand.u32 2147483647, %v911
    %vm938 = vcmp.eq.f32.partialorder %v937, 8.507059e+37
    %v939 = vand.u32 %v911, 2147483648
    %v940 = vor.u32 1.1754944e-38, %v939
    %v941 = vsel %vm938, %v940, %v936
    %v942 = vmul.f32 1.0, %v941
    %v943 = vrcp.pop %v912
    %v944 = vmul.f32 %v912, %v943
    %v945 = vsub.f32 1.0, %v944
    %v946 = vmul.f32 %v943, %v945
    %v947 = vadd.f32 %v943, %v946
    %vm948 = vweird.f32 %v912
    %vm949 = vweird.f32 %v943
    %vm950 = vmor %vm948, %vm949
    %v951 = vsel %vm950, %v943, %v947
    %v952 = vand.u32 2147483647, %v912
    %vm953 = vcmp.eq.f32.partialorder %v952, 8.507059e+37
    %v954 = vand.u32 %v912, 2147483648
    %v955 = vor.u32 1.1754944e-38, %v954
    %v956 = vsel %vm953, %v955, %v951
    %v957 = vmul.f32 1.0, %v956
    %v958 = vtanh.pop %v899
    %v959 = vmul.f32 %v942, %v741
    %v960 = vmul.f32 %v927, %v958
    %v961 = vadd.f32 %v959, %v960
    %v962 = vtanh.pop %v961
    %v963 = vmul.f32 %v957, %v962
    %s964 = scalar_lea.vmem [#allocation8], 16
    %965 = vst [vmem:[%s964] sm:$0xff] %v963
    %s966 = smul.u32 3, 4
    %s967 = smul.addr %s966, 8
    %s968 = scalar_lea.vmem [#allocation2], %s967
    %v969 = vld [vmem:[%s968] sm:$0xff]
    %v970 = vld [vmem:[%s968 + $0x8] sm:$0xff]
    %v971 = vld [vmem:[%s968 + $0x10] sm:$0xff]
    %v972 = vld [vmem:[%s968 + $0x18] sm:$0xff]
    %v973 = vld [vmem:[#allocation3] sm:$0xff]
    %v974 = vld [vmem:[#allocation3 + $0x8] sm:$0xff]
    %v975 = vld [vmem:[#allocation3 + $0x10] sm:$0xff]
    %v976 = vld [vmem:[#allocation3 + $0x18] sm:$0xff]
    %v977 = vld [vmem:[#allocation3 + $0x20] sm:$0xff]
    %v978 = vld [vmem:[#allocation3 + $0x28] sm:$0xff]
    %v979 = vld [vmem:[#allocation3 + $0x30] sm:$0xff]
    %v980 = vld [vmem:[#allocation3 + $0x38] sm:$0xff]
    %v981 = vld [vmem:[#allocation3 + $0x40] sm:$0xff]
    %v982 = vld [vmem:[#allocation3 + $0x48] sm:$0xff]
    %v983 = vld [vmem:[#allocation3 + $0x50] sm:$0xff]
    %v984 = vld [vmem:[#allocation3 + $0x58] sm:$0xff]
    %v985 = vld [vmem:[#allocation3 + $0x60] sm:$0xff]
    %v986 = vld [vmem:[#allocation3 + $0x68] sm:$0xff]
    %v987 = vld [vmem:[#allocation3 + $0x70] sm:$0xff]
    %v988 = vld [vmem:[#allocation3 + $0x78] sm:$0xff]
    %v989 = vld [vmem:[#allocation3 + $0x80] sm:$0xff]
    %v990 = vld [vmem:[#allocation3 + $0x88] sm:$0xff]
    %v991 = vld [vmem:[#allocation3 + $0x90] sm:$0xff]
    %v992 = vld [vmem:[#allocation3 + $0x98] sm:$0xff]
    %v993 = vld [vmem:[#allocation3 + $0xa0] sm:$0xff]
    %v994 = vld [vmem:[#allocation3 + $0xa8] sm:$0xff]
    %v995 = vld [vmem:[#allocation3 + $0xb0] sm:$0xff]
    %v996 = vld [vmem:[#allocation3 + $0xb8] sm:$0xff]
    %v997 = vld [vmem:[#allocation3 + $0xc0] sm:$0xff]
    %v998 = vld [vmem:[#allocation3 + $0xc8] sm:$0xff]
    %v999 = vld [vmem:[#allocation3 + $0xd0] sm:$0xff]
    %v1000 = vld [vmem:[#allocation3 + $0xd8] sm:$0xff]
    %v1001 = vld [vmem:[#allocation3 + $0xe0] sm:$0xff]
    %v1002 = vld [vmem:[#allocation3 + $0xe8] sm:$0xff]
    %v1003 = vld [vmem:[#allocation3 + $0xf0] sm:$0xff]
    %v1004 = vld [vmem:[#allocation3 + $0xf8] sm:$0xff]
    %v1005 = vld [vmem:[#allocation3 + $0x100] sm:$0xff]
    %v1006 = vld [vmem:[#allocation3 + $0x108] sm:$0xff]
    %v1007 = vld [vmem:[#allocation3 + $0x110] sm:$0xff]
    %v1008 = vld [vmem:[#allocation3 + $0x118] sm:$0xff]
    %v1009 = vld [vmem:[#allocation3 + $0x120] sm:$0xff]
    %v1010 = vld [vmem:[#allocation3 + $0x128] sm:$0xff]
    %v1011 = vld [vmem:[#allocation3 + $0x130] sm:$0xff]
    %v1012 = vld [vmem:[#allocation3 + $0x138] sm:$0xff]
    %v1013 = vld [vmem:[#allocation3 + $0x140] sm:$0xff]
    %v1014 = vld [vmem:[#allocation3 + $0x148] sm:$0xff]
    %v1015 = vld [vmem:[#allocation3 + $0x150] sm:$0xff]
    %v1016 = vld [vmem:[#allocation3 + $0x158] sm:$0xff]
    %v1017 = vld [vmem:[#allocation3 + $0x160] sm:$0xff]
    %v1018 = vld [vmem:[#allocation3 + $0x168] sm:$0xff]
    %v1019 = vld [vmem:[#allocation3 + $0x170] sm:$0xff]
    %v1020 = vld [vmem:[#allocation3 + $0x178] sm:$0xff]
    %v1021 = vld [vmem:[#allocation3 + $0x180] sm:$0xff]
    %v1022 = vld [vmem:[#allocation3 + $0x188] sm:$0xff]
    %v1023 = vld [vmem:[#allocation3 + $0x190] sm:$0xff]
    %v1024 = vld [vmem:[#allocation3 + $0x198] sm:$0xff]
    %v1025 = vld [vmem:[#allocation3 + $0x1a0] sm:$0xff]
    %v1026 = vld [vmem:[#allocation3 + $0x1a8] sm:$0xff]
    %v1027 = vld [vmem:[#allocation3 + $0x1b0] sm:$0xff]
    %v1028 = vld [vmem:[#allocation3 + $0x1b8] sm:$0xff]
    %v1029 = vld [vmem:[#allocation3 + $0x1c0] sm:$0xff]
    %v1030 = vld [vmem:[#allocation3 + $0x1c8] sm:$0xff]
    %v1031 = vld [vmem:[#allocation3 + $0x1d0] sm:$0xff]
    %v1032 = vld [vmem:[#allocation3 + $0x1d8] sm:$0xff]
    %v1033 = vld [vmem:[#allocation3 + $0x1e0] sm:$0xff]
    %v1034 = vld [vmem:[#allocation3 + $0x1e8] sm:$0xff]
    %v1035 = vld [vmem:[#allocation3 + $0x1f0] sm:$0xff]
    %v1036 = vld [vmem:[#allocation3 + $0x1f8] sm:$0xff]
    %1037 = vmatpush.msra.mxu0 %v1033
    %1038 = vmatpush.msra.mxu0 %v1029
    %1039 = vmatpush.msra.mxu0 %v1025
    %1040 = vmatpush.msra.mxu0 %v1021
    %1041 = vmatpush.msra.mxu0 %v1017
    %1042 = vmatpush.msra.mxu0 %v1013
    %1043 = vmatpush.msra.mxu0 %v1009
    %1044 = vmatpush.msra.mxu0 %v1005
    %1045 = vmatpush.msra.mxu0 %v1001
    %1046 = vmatpush.msra.mxu0 %v997
    %1047 = vmatpush.msra.mxu0 %v993
    %1048 = vmatpush.msra.mxu0 %v989
    %1049 = vmatpush.msra.mxu0 %v985
    %1050 = vmatpush.msra.mxu0 %v981
    %1051 = vmatpush.msra.mxu0 %v977
    %1052 = vmatpush.msra.mxu0 %v973
    %1053 = vmatmul.f32.gmra.mxu0 %v963
    %v1054 = vpop.f32.mrf.mxu0
    %v1055 = vadd.f32 0.0, %v1054
    %1056 = vdwg.mxu0
    %1057 = vmatpush.msra.mxu0 %v1034
    %1058 = vmatpush.msra.mxu0 %v1030
    %1059 = vmatpush.msra.mxu0 %v1026
    %1060 = vmatpush.msra.mxu0 %v1022
    %1061 = vmatpush.msra.mxu0 %v1018
    %1062 = vmatpush.msra.mxu0 %v1014
    %1063 = vmatpush.msra.mxu0 %v1010
    %1064 = vmatpush.msra.mxu0 %v1006
    %1065 = vmatpush.msra.mxu0 %v1002
    %1066 = vmatpush.msra.mxu0 %v998
    %1067 = vmatpush.msra.mxu0 %v994
    %1068 = vmatpush.msra.mxu0 %v990
    %1069 = vmatpush.msra.mxu0 %v986
    %1070 = vmatpush.msra.mxu0 %v982
    %1071 = vmatpush.msra.mxu0 %v978
    %1072 = vmatpush.msra.mxu0 %v974
    %1073 = vmatmul.f32.gmra.mxu0 %v963
    %v1074 = vpop.f32.mrf.mxu0
    %v1075 = vadd.f32 0.0, %v1074
    %1076 = vdwg.mxu0
    %1077 = vmatpush.msra.mxu0 %v1035
    %1078 = vmatpush.msra.mxu0 %v1031
    %1079 = vmatpush.msra.mxu0 %v1027
    %1080 = vmatpush.msra.mxu0 %v1023
    %1081 = vmatpush.msra.mxu0 %v1019
    %1082 = vmatpush.msra.mxu0 %v1015
    %1083 = vmatpush.msra.mxu0 %v1011
    %1084 = vmatpush.msra.mxu0 %v1007
    %1085 = vmatpush.msra.mxu0 %v1003
    %1086 = vmatpush.msra.mxu0 %v999
    %1087 = vmatpush.msra.mxu0 %v995
    %1088 = vmatpush.msra.mxu0 %v991
    %1089 = vmatpush.msra.mxu0 %v987
    %1090 = vmatpush.msra.mxu0 %v983
    %1091 = vmatpush.msra.mxu0 %v979
    %1092 = vmatpush.msra.mxu0 %v975
    %1093 = vmatmul.f32.gmra.mxu0 %v963
    %v1094 = vpop.f32.mrf.mxu0
    %v1095 = vadd.f32 0.0, %v1094
    %1096 = vdwg.mxu0
    %1097 = vmatpush.msra.mxu0 %v1036
    %1098 = vmatpush.msra.mxu0 %v1032
    %1099 = vmatpush.msra.mxu0 %v1028
    %1100 = vmatpush.msra.mxu0 %v1024
    %1101 = vmatpush.msra.mxu0 %v1020
    %1102 = vmatpush.msra.mxu0 %v1016
    %1103 = vmatpush.msra.mxu0 %v1012
    %1104 = vmatpush.msra.mxu0 %v1008
    %1105 = vmatpush.msra.mxu0 %v1004
    %1106 = vmatpush.msra.mxu0 %v1000
    %1107 = vmatpush.msra.mxu0 %v996
    %1108 = vmatpush.msra.mxu0 %v992
    %1109 = vmatpush.msra.mxu0 %v988
    %1110 = vmatpush.msra.mxu0 %v984
    %1111 = vmatpush.msra.mxu0 %v980
    %1112 = vmatpush.msra.mxu0 %v976
    %1113 = vmatmul.f32.gmra.mxu0 %v963
    %v1114 = vpop.f32.mrf.mxu0
    %v1115 = vadd.f32 0.0, %v1114
    %1116 = vdwg.mxu0
    %v1117 = vadd.f32 %v969, %v1055
    %v1118 = vadd.f32 %v970, %v1075
    %v1119 = vadd.f32 %v971, %v1095
    %v1120 = vadd.f32 %v972, %v1115
    %v1121 = vxor.u32 %v1117, 2147483648
    %v1122 = vxor.u32 %v1118, 2147483648
    %v1123 = vxor.u32 %v1120, 2147483648
    %v1124 = vmul.f32 %v1121, 1.442695
    %v1125 = vpow.pop %v1124
    %v1126 = vmul.f32 %v1122, 1.442695
    %v1127 = vpow.pop %v1126
    %v1128 = vmul.f32 %v1123, 1.442695
    %v1129 = vpow.pop %v1128
    %v1130 = vadd.f32 %v1125, 1.0
    %v1131 = vadd.f32 %v1127, 1.0
    %v1132 = vadd.f32 %v1129, 1.0
    %v1133 = vrcp.pop %v1130
    %v1134 = vmul.f32 %v1130, %v1133
    %v1135 = vsub.f32 1.0, %v1134
    %v1136 = vmul.f32 %v1133, %v1135
    %v1137 = vadd.f32 %v1133, %v1136
    %vm1138 = vweird.f32 %v1130
    %vm1139 = vweird.f32 %v1133
    %vm1140 = vmor %vm1138, %vm1139
    %v1141 = vsel %vm1140, %v1133, %v1137
    %v1142 = vand.u32 2147483647, %v1130
    %vm1143 = vcmp.eq.f32.partialorder %v1142, 8.507059e+37
    %v1144 = vand.u32 %v1130, 2147483648
    %v1145 = vor.u32 1.1754944e-38, %v1144
    %v1146 = vsel %vm1143, %v1145, %v1141
    %v1147 = vmul.f32 1.0, %v1146
    %v1148 = vrcp.pop %v1131
    %v1149 = vmul.f32 %v1131, %v1148
    %v1150 = vsub.f32 1.0, %v1149
    %v1151 = vmul.f32 %v1148, %v1150
    %v1152 = vadd.f32 %v1148, %v1151
    %vm1153 = vweird.f32 %v1131
    %vm1154 = vweird.f32 %v1148
    %vm1155 = vmor %vm1153, %vm1154
    %v1156 = vsel %vm1155, %v1148, %v1152
    %v1157 = vand.u32 2147483647, %v1131
    %vm1158 = vcmp.eq.f32.partialorder %v1157, 8.507059e+37
    %v1159 = vand.u32 %v1131, 2147483648
    %v1160 = vor.u32 1.1754944e-38, %v1159
    %v1161 = vsel %vm1158, %v1160, %v1156
    %v1162 = vmul.f32 1.0, %v1161
    %v1163 = vrcp.pop %v1132
    %v1164 = vmul.f32 %v1132, %v1163
    %v1165 = vsub.f32 1.0, %v1164
    %v1166 = vmul.f32 %v1163, %v1165
    %v1167 = vadd.f32 %v1163, %v1166
    %vm1168 = vweird.f32 %v1132
    %vm1169 = vweird.f32 %v1163
    %vm1170 = vmor %vm1168, %vm1169
    %v1171 = vsel %vm1170, %v1163, %v1167
    %v1172 = vand.u32 2147483647, %v1132
    %vm1173 = vcmp.eq.f32.partialorder %v1172, 8.507059e+37
    %v1174 = vand.u32 %v1132, 2147483648
    %v1175 = vor.u32 1.1754944e-38, %v1174
    %v1176 = vsel %vm1173, %v1175, %v1171
    %v1177 = vmul.f32 1.0, %v1176
    %v1178 = vtanh.pop %v1119
    %v1179 = vmul.f32 %v1162, %v961
    %v1180 = vmul.f32 %v1147, %v1178
    %v1181 = vadd.f32 %v1179, %v1180
    %v1182 = vtanh.pop %v1181
    %v1183 = vmul.f32 %v1177, %v1182
    %s1184 = scalar_lea.vmem [#allocation8], 24
    %1185 = vst [vmem:[%s1184] sm:$0xff] %v1183
    %s1186 = smul.u32 4, 4
    %s1187 = smul.addr %s1186, 8
    %s1188 = scalar_lea.vmem [#allocation2], %s1187
    %v1189 = vld [vmem:[%s1188] sm:$0xff]
    %v1190 = vld [vmem:[%s1188 + $0x8] sm:$0xff]
    %v1191 = vld [vmem:[%s1188 + $0x10] sm:$0xff]
    %v1192 = vld [vmem:[%s1188 + $0x18] sm:$0xff]
    %v1193 = vld [vmem:[#allocation3] sm:$0xff]
    %v1194 = vld [vmem:[#allocation3 + $0x8] sm:$0xff]
    %v1195 = vld [vmem:[#allocation3 + $0x10] sm:$0xff]
    %v1196 = vld [vmem:[#allocation3 + $0x18] sm:$0xff]
    %v1197 = vld [vmem:[#allocation3 + $0x20] sm:$0xff]
    %v1198 = vld [vmem:[#allocation3 + $0x28] sm:$0xff]
    %v1199 = vld [vmem:[#allocation3 + $0x30] sm:$0xff]
    %v1200 = vld [vmem:[#allocation3 + $0x38] sm:$0xff]
    %v1201 = vld [vmem:[#allocation3 + $0x40] sm:$0xff]
    %v1202 = vld [vmem:[#allocation3 + $0x48] sm:$0xff]
    %v1203 = vld [vmem:[#allocation3 + $0x50] sm:$0xff]
    %v1204 = vld [vmem:[#allocation3 + $0x58] sm:$0xff]
    %v1205 = vld [vmem:[#allocation3 + $0x60] sm:$0xff]
    %v1206 = vld [vmem:[#allocation3 + $0x68] sm:$0xff]
    %v1207 = vld [vmem:[#allocation3 + $0x70] sm:$0xff]
    %v1208 = vld [vmem:[#allocation3 + $0x78] sm:$0xff]
    %v1209 = vld [vmem:[#allocation3 + $0x80] sm:$0xff]
    %v1210 = vld [vmem:[#allocation3 + $0x88] sm:$0xff]
    %v1211 = vld [vmem:[#allocation3 + $0x90] sm:$0xff]
    %v1212 = vld [vmem:[#allocation3 + $0x98] sm:$0xff]
    %v1213 = vld [vmem:[#allocation3 + $0xa0] sm:$0xff]
    %v1214 = vld [vmem:[#allocation3 + $0xa8] sm:$0xff]
    %v1215 = vld [vmem:[#allocation3 + $0xb0] sm:$0xff]
    %v1216 = vld [vmem:[#allocation3 + $0xb8] sm:$0xff]
    %v1217 = vld [vmem:[#allocation3 + $0xc0] sm:$0xff]
    %v1218 = vld [vmem:[#allocation3 + $0xc8] sm:$0xff]
    %v1219 = vld [vmem:[#allocation3 + $0xd0] sm:$0xff]
    %v1220 = vld [vmem:[#allocation3 + $0xd8] sm:$0xff]
    %v1221 = vld [vmem:[#allocation3 + $0xe0] sm:$0xff]
    %v1222 = vld [vmem:[#allocation3 + $0xe8] sm:$0xff]
    %v1223 = vld [vmem:[#allocation3 + $0xf0] sm:$0xff]
    %v1224 = vld [vmem:[#allocation3 + $0xf8] sm:$0xff]
    %v1225 = vld [vmem:[#allocation3 + $0x100] sm:$0xff]
    %v1226 = vld [vmem:[#allocation3 + $0x108] sm:$0xff]
    %v1227 = vld [vmem:[#allocation3 + $0x110] sm:$0xff]
    %v1228 = vld [vmem:[#allocation3 + $0x118] sm:$0xff]
    %v1229 = vld [vmem:[#allocation3 + $0x120] sm:$0xff]
    %v1230 = vld [vmem:[#allocation3 + $0x128] sm:$0xff]
    %v1231 = vld [vmem:[#allocation3 + $0x130] sm:$0xff]
    %v1232 = vld [vmem:[#allocation3 + $0x138] sm:$0xff]
    %v1233 = vld [vmem:[#allocation3 + $0x140] sm:$0xff]
    %v1234 = vld [vmem:[#allocation3 + $0x148] sm:$0xff]
    %v1235 = vld [vmem:[#allocation3 + $0x150] sm:$0xff]
    %v1236 = vld [vmem:[#allocation3 + $0x158] sm:$0xff]
    %v1237 = vld [vmem:[#allocation3 + $0x160] sm:$0xff]
    %v1238 = vld [vmem:[#allocation3 + $0x168] sm:$0xff]
    %v1239 = vld [vmem:[#allocation3 + $0x170] sm:$0xff]
    %v1240 = vld [vmem:[#allocation3 + $0x178] sm:$0xff]
    %v1241 = vld [vmem:[#allocation3 + $0x180] sm:$0xff]
    %v1242 = vld [vmem:[#allocation3 + $0x188] sm:$0xff]
    %v1243 = vld [vmem:[#allocation3 + $0x190] sm:$0xff]
    %v1244 = vld [vmem:[#allocation3 + $0x198] sm:$0xff]
    %v1245 = vld [vmem:[#allocation3 + $0x1a0] sm:$0xff]
    %v1246 = vld [vmem:[#allocation3 + $0x1a8] sm:$0xff]
    %v1247 = vld [vmem:[#allocation3 + $0x1b0] sm:$0xff]
    %v1248 = vld [vmem:[#allocation3 + $0x1b8] sm:$0xff]
    %v1249 = vld [vmem:[#allocation3 + $0x1c0] sm:$0xff]
    %v1250 = vld [vmem:[#allocation3 + $0x1c8] sm:$0xff]
    %v1251 = vld [vmem:[#allocation3 + $0x1d0] sm:$0xff]
    %v1252 = vld [vmem:[#allocation3 + $0x1d8] sm:$0xff]
    %v1253 = vld [vmem:[#allocation3 + $0x1e0] sm:$0xff]
    %v1254 = vld [vmem:[#allocation3 + $0x1e8] sm:$0xff]
    %v1255 = vld [vmem:[#allocation3 + $0x1f0] sm:$0xff]
    %v1256 = vld [vmem:[#allocation3 + $0x1f8] sm:$0xff]
    %1257 = vmatpush.msra.mxu0 %v1253
    %1258 = vmatpush.msra.mxu0 %v1249
    %1259 = vmatpush.msra.mxu0 %v1245
    %1260 = vmatpush.msra.mxu0 %v1241
    %1261 = vmatpush.msra.mxu0 %v1237
    %1262 = vmatpush.msra.mxu0 %v1233
    %1263 = vmatpush.msra.mxu0 %v1229
    %1264 = vmatpush.msra.mxu0 %v1225
    %1265 = vmatpush.msra.mxu0 %v1221
    %1266 = vmatpush.msra.mxu0 %v1217
    %1267 = vmatpush.msra.mxu0 %v1213
    %1268 = vmatpush.msra.mxu0 %v1209
    %1269 = vmatpush.msra.mxu0 %v1205
    %1270 = vmatpush.msra.mxu0 %v1201
    %1271 = vmatpush.msra.mxu0 %v1197
    %1272 = vmatpush.msra.mxu0 %v1193
    %1273 = vmatmul.f32.gmra.mxu0 %v1183
    %v1274 = vpop.f32.mrf.mxu0
    %v1275 = vadd.f32 0.0, %v1274
    %1276 = vdwg.mxu0
    %1277 = vmatpush.msra.mxu0 %v1254
    %1278 = vmatpush.msra.mxu0 %v1250
    %1279 = vmatpush.msra.mxu0 %v1246
    %1280 = vmatpush.msra.mxu0 %v1242
    %1281 = vmatpush.msra.mxu0 %v1238
    %1282 = vmatpush.msra.mxu0 %v1234
    %1283 = vmatpush.msra.mxu0 %v1230
    %1284 = vmatpush.msra.mxu0 %v1226
    %1285 = vmatpush.msra.mxu0 %v1222
    %1286 = vmatpush.msra.mxu0 %v1218
    %1287 = vmatpush.msra.mxu0 %v1214
    %1288 = vmatpush.msra.mxu0 %v1210
    %1289 = vmatpush.msra.mxu0 %v1206
    %1290 = vmatpush.msra.mxu0 %v1202
    %1291 = vmatpush.msra.mxu0 %v1198
    %1292 = vmatpush.msra.mxu0 %v1194
    %1293 = vmatmul.f32.gmra.mxu0 %v1183
    %v1294 = vpop.f32.mrf.mxu0
    %v1295 = vadd.f32 0.0, %v1294
    %1296 = vdwg.mxu0
    %1297 = vmatpush.msra.mxu0 %v1255
    %1298 = vmatpush.msra.mxu0 %v1251
    %1299 = vmatpush.msra.mxu0 %v1247
    %1300 = vmatpush.msra.mxu0 %v1243
    %1301 = vmatpush.msra.mxu0 %v1239
    %1302 = vmatpush.msra.mxu0 %v1235
    %1303 = vmatpush.msra.mxu0 %v1231
    %1304 = vmatpush.msra.mxu0 %v1227
    %1305 = vmatpush.msra.mxu0 %v1223
    %1306 = vmatpush.msra.mxu0 %v1219
    %1307 = vmatpush.msra.mxu0 %v1215
    %1308 = vmatpush.msra.mxu0 %v1211
    %1309 = vmatpush.msra.mxu0 %v1207
    %1310 = vmatpush.msra.mxu0 %v1203
    %1311 = vmatpush.msra.mxu0 %v1199
    %1312 = vmatpush.msra.mxu0 %v1195
    %1313 = vmatmul.f32.gmra.mxu0 %v1183
    %v1314 = vpop.f32.mrf.mxu0
    %v1315 = vadd.f32 0.0, %v1314
    %1316 = vdwg.mxu0
    %1317 = vmatpush.msra.mxu0 %v1256
    %1318 = vmatpush.msra.mxu0 %v1252
    %1319 = vmatpush.msra.mxu0 %v1248
    %1320 = vmatpush.msra.mxu0 %v1244
    %1321 = vmatpush.msra.mxu0 %v1240
    %1322 = vmatpush.msra.mxu0 %v1236
    %1323 = vmatpush.msra.mxu0 %v1232
    %1324 = vmatpush.msra.mxu0 %v1228
    %1325 = vmatpush.msra.mxu0 %v1224
    %1326 = vmatpush.msra.mxu0 %v1220
    %1327 = vmatpush.msra.mxu0 %v1216
    %1328 = vmatpush.msra.mxu0 %v1212
    %1329 = vmatpush.msra.mxu0 %v1208
    %1330 = vmatpush.msra.mxu0 %v1204
    %1331 = vmatpush.msra.mxu0 %v1200
    %1332 = vmatpush.msra.mxu0 %v1196
    %1333 = vmatmul.f32.gmra.mxu0 %v1183
    %v1334 = vpop.f32.mrf.mxu0
    %v1335 = vadd.f32 0.0, %v1334
    %1336 = vdwg.mxu0
    %v1337 = vadd.f32 %v1189, %v1275
    %v1338 = vadd.f32 %v1190, %v1295
    %v1339 = vadd.f32 %v1191, %v1315
    %v1340 = vadd.f32 %v1192, %v1335
    %v1341 = vxor.u32 %v1337, 2147483648
    %v1342 = vxor.u32 %v1338, 2147483648
    %v1343 = vxor.u32 %v1340, 2147483648
    %v1344 = vmul.f32 %v1341, 1.442695
    %v1345 = vpow.pop %v1344
    %v1346 = vmul.f32 %v1342, 1.442695
    %v1347 = vpow.pop %v1346
    %v1348 = vmul.f32 %v1343, 1.442695
    %v1349 = vpow.pop %v1348
    %v1350 = vadd.f32 %v1345, 1.0
    %v1351 = vadd.f32 %v1347, 1.0
    %v1352 = vadd.f32 %v1349, 1.0
    %v1353 = vrcp.pop %v1350
    %v1354 = vmul.f32 %v1350, %v1353
    %v1355 = vsub.f32 1.0, %v1354
    %v1356 = vmul.f32 %v1353, %v1355
    %v1357 = vadd.f32 %v1353, %v1356
    %vm1358 = vweird.f32 %v1350
    %vm1359 = vweird.f32 %v1353
    %vm1360 = vmor %vm1358, %vm1359
    %v1361 = vsel %vm1360, %v1353, %v1357
    %v1362 = vand.u32 2147483647, %v1350
    %vm1363 = vcmp.eq.f32.partialorder %v1362, 8.507059e+37
    %v1364 = vand.u32 %v1350, 2147483648
    %v1365 = vor.u32 1.1754944e-38, %v1364
    %v1366 = vsel %vm1363, %v1365, %v1361
    %v1367 = vmul.f32 1.0, %v1366
    %v1368 = vrcp.pop %v1351
    %v1369 = vmul.f32 %v1351, %v1368
    %v1370 = vsub.f32 1.0, %v1369
    %v1371 = vmul.f32 %v1368, %v1370
    %v1372 = vadd.f32 %v1368, %v1371
    %vm1373 = vweird.f32 %v1351
    %vm1374 = vweird.f32 %v1368
    %vm1375 = vmor %vm1373, %vm1374
    %v1376 = vsel %vm1375, %v1368, %v1372
    %v1377 = vand.u32 2147483647, %v1351
    %vm1378 = vcmp.eq.f32.partialorder %v1377, 8.507059e+37
    %v1379 = vand.u32 %v1351, 2147483648
    %v1380 = vor.u32 1.1754944e-38, %v1379
    %v1381 = vsel %vm1378, %v1380, %v1376
    %v1382 = vmul.f32 1.0, %v1381
    %v1383 = vrcp.pop %v1352
    %v1384 = vmul.f32 %v1352, %v1383
    %v1385 = vsub.f32 1.0, %v1384
    %v1386 = vmul.f32 %v1383, %v1385
    %v1387 = vadd.f32 %v1383, %v1386
    %vm1388 = vweird.f32 %v1352
    %vm1389 = vweird.f32 %v1383
    %vm1390 = vmor %vm1388, %vm1389
    %v1391 = vsel %vm1390, %v1383, %v1387
    %v1392 = vand.u32 2147483647, %v1352
    %vm1393 = vcmp.eq.f32.partialorder %v1392, 8.507059e+37
    %v1394 = vand.u32 %v1352, 2147483648
    %v1395 = vor.u32 1.1754944e-38, %v1394
    %v1396 = vsel %vm1393, %v1395, %v1391
    %v1397 = vmul.f32 1.0, %v1396
    %v1398 = vtanh.pop %v1339
    %v1399 = vmul.f32 %v1382, %v1181
    %v1400 = vmul.f32 %v1367, %v1398
    %v1401 = vadd.f32 %v1399, %v1400
    %v1402 = vtanh.pop %v1401
    %v1403 = vmul.f32 %v1397, %v1402
    %s1404 = scalar_lea.vmem [#allocation8], 32
    %1405 = vst [vmem:[%s1404] sm:$0xff] %v1403
    %s1406 = smul.u32 5, 4
    %s1407 = smul.addr %s1406, 8
    %s1408 = scalar_lea.vmem [#allocation2], %s1407
    %v1409 = vld [vmem:[%s1408] sm:$0xff]
    %v1410 = vld [vmem:[%s1408 + $0x8] sm:$0xff]
    %v1411 = vld [vmem:[%s1408 + $0x10] sm:$0xff]
    %v1412 = vld [vmem:[%s1408 + $0x18] sm:$0xff]
    %v1413 = vld [vmem:[#allocation3] sm:$0xff]
    %v1414 = vld [vmem:[#allocation3 + $0x8] sm:$0xff]
    %v1415 = vld [vmem:[#allocation3 + $0x10] sm:$0xff]
    %v1416 = vld [vmem:[#allocation3 + $0x18] sm:$0xff]
    %v1417 = vld [vmem:[#allocation3 + $0x20] sm:$0xff]
    %v1418 = vld [vmem:[#allocation3 + $0x28] sm:$0xff]
    %v1419 = vld [vmem:[#allocation3 + $0x30] sm:$0xff]
    %v1420 = vld [vmem:[#allocation3 + $0x38] sm:$0xff]
    %v1421 = vld [vmem:[#allocation3 + $0x40] sm:$0xff]
    %v1422 = vld [vmem:[#allocation3 + $0x48] sm:$0xff]
    %v1423 = vld [vmem:[#allocation3 + $0x50] sm:$0xff]
    %v1424 = vld [vmem:[#allocation3 + $0x58] sm:$0xff]
    %v1425 = vld [vmem:[#allocation3 + $0x60] sm:$0xff]
    %v1426 = vld [vmem:[#allocation3 + $0x68] sm:$0xff]
    %v1427 = vld [vmem:[#allocation3 + $0x70] sm:$0xff]
    %v1428 = vld [vmem:[#allocation3 + $0x78] sm:$0xff]
    %v1429 = vld [vmem:[#allocation3 + $0x80] sm:$0xff]
    %v1430 = vld [vmem:[#allocation3 + $0x88] sm:$0xff]
    %v1431 = vld [vmem:[#allocation3 + $0x90] sm:$0xff]
    %v1432 = vld [vmem:[#allocation3 + $0x98] sm:$0xff]
    %v1433 = vld [vmem:[#allocation3 + $0xa0] sm:$0xff]
    %v1434 = vld [vmem:[#allocation3 + $0xa8] sm:$0xff]
    %v1435 = vld [vmem:[#allocation3 + $0xb0] sm:$0xff]
    %v1436 = vld [vmem:[#allocation3 + $0xb8] sm:$0xff]
    %v1437 = vld [vmem:[#allocation3 + $0xc0] sm:$0xff]
    %v1438 = vld [vmem:[#allocation3 + $0xc8] sm:$0xff]
    %v1439 = vld [vmem:[#allocation3 + $0xd0] sm:$0xff]
    %v1440 = vld [vmem:[#allocation3 + $0xd8] sm:$0xff]
    %v1441 = vld [vmem:[#allocation3 + $0xe0] sm:$0xff]
    %v1442 = vld [vmem:[#allocation3 + $0xe8] sm:$0xff]
    %v1443 = vld [vmem:[#allocation3 + $0xf0] sm:$0xff]
    %v1444 = vld [vmem:[#allocation3 + $0xf8] sm:$0xff]
    %v1445 = vld [vmem:[#allocation3 + $0x100] sm:$0xff]
    %v1446 = vld [vmem:[#allocation3 + $0x108] sm:$0xff]
    %v1447 = vld [vmem:[#allocation3 + $0x110] sm:$0xff]
    %v1448 = vld [vmem:[#allocation3 + $0x118] sm:$0xff]
    %v1449 = vld [vmem:[#allocation3 + $0x120] sm:$0xff]
    %v1450 = vld [vmem:[#allocation3 + $0x128] sm:$0xff]
    %v1451 = vld [vmem:[#allocation3 + $0x130] sm:$0xff]
    %v1452 = vld [vmem:[#allocation3 + $0x138] sm:$0xff]
    %v1453 = vld [vmem:[#allocation3 + $0x140] sm:$0xff]
    %v1454 = vld [vmem:[#allocation3 + $0x148] sm:$0xff]
    %v1455 = vld [vmem:[#allocation3 + $0x150] sm:$0xff]
    %v1456 = vld [vmem:[#allocation3 + $0x158] sm:$0xff]
    %v1457 = vld [vmem:[#allocation3 + $0x160] sm:$0xff]
    %v1458 = vld [vmem:[#allocation3 + $0x168] sm:$0xff]
    %v1459 = vld [vmem:[#allocation3 + $0x170] sm:$0xff]
    %v1460 = vld [vmem:[#allocation3 + $0x178] sm:$0xff]
    %v1461 = vld [vmem:[#allocation3 + $0x180] sm:$0xff]
    %v1462 = vld [vmem:[#allocation3 + $0x188] sm:$0xff]
    %v1463 = vld [vmem:[#allocation3 + $0x190] sm:$0xff]
    %v1464 = vld [vmem:[#allocation3 + $0x198] sm:$0xff]
    %v1465 = vld [vmem:[#allocation3 + $0x1a0] sm:$0xff]
    %v1466 = vld [vmem:[#allocation3 + $0x1a8] sm:$0xff]
    %v1467 = vld [vmem:[#allocation3 + $0x1b0] sm:$0xff]
    %v1468 = vld [vmem:[#allocation3 + $0x1b8] sm:$0xff]
    %v1469 = vld [vmem:[#allocation3 + $0x1c0] sm:$0xff]
    %v1470 = vld [vmem:[#allocation3 + $0x1c8] sm:$0xff]
    %v1471 = vld [vmem:[#allocation3 + $0x1d0] sm:$0xff]
    %v1472 = vld [vmem:[#allocation3 + $0x1d8] sm:$0xff]
    %v1473 = vld [vmem:[#allocation3 + $0x1e0] sm:$0xff]
    %v1474 = vld [vmem:[#allocation3 + $0x1e8] sm:$0xff]
    %v1475 = vld [vmem:[#allocation3 + $0x1f0] sm:$0xff]
    %v1476 = vld [vmem:[#allocation3 + $0x1f8] sm:$0xff]
    %1477 = vmatpush.msra.mxu0 %v1473
    %1478 = vmatpush.msra.mxu0 %v1469
    %1479 = vmatpush.msra.mxu0 %v1465
    %1480 = vmatpush.msra.mxu0 %v1461
    %1481 = vmatpush.msra.mxu0 %v1457
    %1482 = vmatpush.msra.mxu0 %v1453
    %1483 = vmatpush.msra.mxu0 %v1449
    %1484 = vmatpush.msra.mxu0 %v1445
    %1485 = vmatpush.msra.mxu0 %v1441
    %1486 = vmatpush.msra.mxu0 %v1437
    %1487 = vmatpush.msra.mxu0 %v1433
    %1488 = vmatpush.msra.mxu0 %v1429
    %1489 = vmatpush.msra.mxu0 %v1425
    %1490 = vmatpush.msra.mxu0 %v1421
    %1491 = vmatpush.msra.mxu0 %v1417
    %1492 = vmatpush.msra.mxu0 %v1413
    %1493 = vmatmul.f32.gmra.mxu0 %v1403
    %v1494 = vpop.f32.mrf.mxu0
    %v1495 = vadd.f32 0.0, %v1494
    %1496 = vdwg.mxu0
    %1497 = vmatpush.msra.mxu0 %v1474
    %1498 = vmatpush.msra.mxu0 %v1470
    %1499 = vmatpush.msra.mxu0 %v1466
    %1500 = vmatpush.msra.mxu0 %v1462
    %1501 = vmatpush.msra.mxu0 %v1458
    %1502 = vmatpush.msra.mxu0 %v1454
    %1503 = vmatpush.msra.mxu0 %v1450
    %1504 = vmatpush.msra.mxu0 %v1446
    %1505 = vmatpush.msra.mxu0 %v1442
    %1506 = vmatpush.msra.mxu0 %v1438
    %1507 = vmatpush.msra.mxu0 %v1434
    %1508 = vmatpush.msra.mxu0 %v1430
    %1509 = vmatpush.msra.mxu0 %v1426
    %1510 = vmatpush.msra.mxu0 %v1422
    %1511 = vmatpush.msra.mxu0 %v1418
    %1512 = vmatpush.msra.mxu0 %v1414
    %1513 = vmatmul.f32.gmra.mxu0 %v1403
    %v1514 = vpop.f32.mrf.mxu0
    %v1515 = vadd.f32 0.0, %v1514
    %1516 = vdwg.mxu0
    %1517 = vmatpush.msra.mxu0 %v1475
    %1518 = vmatpush.msra.mxu0 %v1471
    %1519 = vmatpush.msra.mxu0 %v1467
    %1520 = vmatpush.msra.mxu0 %v1463
    %1521 = vmatpush.msra.mxu0 %v1459
    %1522 = vmatpush.msra.mxu0 %v1455
    %1523 = vmatpush.msra.mxu0 %v1451
    %1524 = vmatpush.msra.mxu0 %v1447
    %1525 = vmatpush.msra.mxu0 %v1443
    %1526 = vmatpush.msra.mxu0 %v1439
    %1527 = vmatpush.msra.mxu0 %v1435
    %1528 = vmatpush.msra.mxu0 %v1431
    %1529 = vmatpush.msra.mxu0 %v1427
    %1530 = vmatpush.msra.mxu0 %v1423
    %1531 = vmatpush.msra.mxu0 %v1419
    %1532 = vmatpush.msra.mxu0 %v1415
    %1533 = vmatmul.f32.gmra.mxu0 %v1403
    %v1534 = vpop.f32.mrf.mxu0
    %v1535 = vadd.f32 0.0, %v1534
    %1536 = vdwg.mxu0
    %1537 = vmatpush.msra.mxu0 %v1476
    %1538 = vmatpush.msra.mxu0 %v1472
    %1539 = vmatpush.msra.mxu0 %v1468
    %1540 = vmatpush.msra.mxu0 %v1464
    %1541 = vmatpush.msra.mxu0 %v1460
    %1542 = vmatpush.msra.mxu0 %v1456
    %1543 = vmatpush.msra.mxu0 %v1452
    %1544 = vmatpush.msra.mxu0 %v1448
    %1545 = vmatpush.msra.mxu0 %v1444
    %1546 = vmatpush.msra.mxu0 %v1440
    %1547 = vmatpush.msra.mxu0 %v1436
    %1548 = vmatpush.msra.mxu0 %v1432
    %1549 = vmatpush.msra.mxu0 %v1428
    %1550 = vmatpush.msra.mxu0 %v1424
    %1551 = vmatpush.msra.mxu0 %v1420
    %1552 = vmatpush.msra.mxu0 %v1416
    %1553 = vmatmul.f32.gmra.mxu0 %v1403
    %v1554 = vpop.f32.mrf.mxu0
    %v1555 = vadd.f32 0.0, %v1554
    %1556 = vdwg.mxu0
    %v1557 = vadd.f32 %v1409, %v1495
    %v1558 = vadd.f32 %v1410, %v1515
    %v1559 = vadd.f32 %v1411, %v1535
    %v1560 = vadd.f32 %v1412, %v1555
    %v1561 = vxor.u32 %v1557, 2147483648
    %v1562 = vxor.u32 %v1558, 2147483648
    %v1563 = vxor.u32 %v1560, 2147483648
    %v1564 = vmul.f32 %v1561, 1.442695
    %v1565 = vpow.pop %v1564
    %v1566 = vmul.f32 %v1562, 1.442695
    %v1567 = vpow.pop %v1566
    %v1568 = vmul.f32 %v1563, 1.442695
    %v1569 = vpow.pop %v1568
    %v1570 = vadd.f32 %v1565, 1.0
    %v1571 = vadd.f32 %v1567, 1.0
    %v1572 = vadd.f32 %v1569, 1.0
    %v1573 = vrcp.pop %v1570
    %v1574 = vmul.f32 %v1570, %v1573
    %v1575 = vsub.f32 1.0, %v1574
    %v1576 = vmul.f32 %v1573, %v1575
    %v1577 = vadd.f32 %v1573, %v1576
    %vm1578 = vweird.f32 %v1570
    %vm1579 = vweird.f32 %v1573
    %vm1580 = vmor %vm1578, %vm1579
    %v1581 = vsel %vm1580, %v1573, %v1577
    %v1582 = vand.u32 2147483647, %v1570
    %vm1583 = vcmp.eq.f32.partialorder %v1582, 8.507059e+37
    %v1584 = vand.u32 %v1570, 2147483648
    %v1585 = vor.u32 1.1754944e-38, %v1584
    %v1586 = vsel %vm1583, %v1585, %v1581
    %v1587 = vmul.f32 1.0, %v1586
    %v1588 = vrcp.pop %v1571
    %v1589 = vmul.f32 %v1571, %v1588
    %v1590 = vsub.f32 1.0, %v1589
    %v1591 = vmul.f32 %v1588, %v1590
    %v1592 = vadd.f32 %v1588, %v1591
    %vm1593 = vweird.f32 %v1571
    %vm1594 = vweird.f32 %v1588
    %vm1595 = vmor %vm1593, %vm1594
    %v1596 = vsel %vm1595, %v1588, %v1592
    %v1597 = vand.u32 2147483647, %v1571
    %vm1598 = vcmp.eq.f32.partialorder %v1597, 8.507059e+37
    %v1599 = vand.u32 %v1571, 2147483648
    %v1600 = vor.u32 1.1754944e-38, %v1599
    %v1601 = vsel %vm1598, %v1600, %v1596
    %v1602 = vmul.f32 1.0, %v1601
    %v1603 = vrcp.pop %v1572
    %v1604 = vmul.f32 %v1572, %v1603
    %v1605 = vsub.f32 1.0, %v1604
    %v1606 = vmul.f32 %v1603, %v1605
    %v1607 = vadd.f32 %v1603, %v1606
    %vm1608 = vweird.f32 %v1572
    %vm1609 = vweird.f32 %v1603
    %vm1610 = vmor %vm1608, %vm1609
    %v1611 = vsel %vm1610, %v1603, %v1607
    %v1612 = vand.u32 2147483647, %v1572
    %vm1613 = vcmp.eq.f32.partialorder %v1612, 8.507059e+37
    %v1614 = vand.u32 %v1572, 2147483648
    %v1615 = vor.u32 1.1754944e-38, %v1614
    %v1616 = vsel %vm1613, %v1615, %v1611
    %v1617 = vmul.f32 1.0, %v1616
    %v1618 = vtanh.pop %v1559
    %v1619 = vmul.f32 %v1602, %v1401
    %v1620 = vmul.f32 %v1587, %v1618
    %v1621 = vadd.f32 %v1619, %v1620
    %v1622 = vtanh.pop %v1621
    %v1623 = vmul.f32 %v1617, %v1622
    %s1624 = scalar_lea.vmem [#allocation8], 40
    %1625 = vst [vmem:[%s1624] sm:$0xff] %v1623
    %s1626 = smul.u32 6, 4
    %s1627 = smul.addr %s1626, 8
    %s1628 = scalar_lea.vmem [#allocation2], %s1627
    %v1629 = vld [vmem:[%s1628] sm:$0xff]
    %v1630 = vld [vmem:[%s1628 + $0x8] sm:$0xff]
    %v1631 = vld [vmem:[%s1628 + $0x10] sm:$0xff]
    %v1632 = vld [vmem:[%s1628 + $0x18] sm:$0xff]
    %v1633 = vld [vmem:[#allocation3] sm:$0xff]
    %v1634 = vld [vmem:[#allocation3 + $0x8] sm:$0xff]
    %v1635 = vld [vmem:[#allocation3 + $0x10] sm:$0xff]
    %v1636 = vld [vmem:[#allocation3 + $0x18] sm:$0xff]
    %v1637 = vld [vmem:[#allocation3 + $0x20] sm:$0xff]
    %v1638 = vld [vmem:[#allocation3 + $0x28] sm:$0xff]
    %v1639 = vld [vmem:[#allocation3 + $0x30] sm:$0xff]
    %v1640 = vld [vmem:[#allocation3 + $0x38] sm:$0xff]
    %v1641 = vld [vmem:[#allocation3 + $0x40] sm:$0xff]
    %v1642 = vld [vmem:[#allocation3 + $0x48] sm:$0xff]
    %v1643 = vld [vmem:[#allocation3 + $0x50] sm:$0xff]
    %v1644 = vld [vmem:[#allocation3 + $0x58] sm:$0xff]
    %v1645 = vld [vmem:[#allocation3 + $0x60] sm:$0xff]
    %v1646 = vld [vmem:[#allocation3 + $0x68] sm:$0xff]
    %v1647 = vld [vmem:[#allocation3 + $0x70] sm:$0xff]
    %v1648 = vld [vmem:[#allocation3 + $0x78] sm:$0xff]
    %v1649 = vld [vmem:[#allocation3 + $0x80] sm:$0xff]
    %v1650 = vld [vmem:[#allocation3 + $0x88] sm:$0xff]
    %v1651 = vld [vmem:[#allocation3 + $0x90] sm:$0xff]
    %v1652 = vld [vmem:[#allocation3 + $0x98] sm:$0xff]
    %v1653 = vld [vmem:[#allocation3 + $0xa0] sm:$0xff]
    %v1654 = vld [vmem:[#allocation3 + $0xa8] sm:$0xff]
    %v1655 = vld [vmem:[#allocation3 + $0xb0] sm:$0xff]
    %v1656 = vld [vmem:[#allocation3 + $0xb8] sm:$0xff]
    %v1657 = vld [vmem:[#allocation3 + $0xc0] sm:$0xff]
    %v1658 = vld [vmem:[#allocation3 + $0xc8] sm:$0xff]
    %v1659 = vld [vmem:[#allocation3 + $0xd0] sm:$0xff]
    %v1660 = vld [vmem:[#allocation3 + $0xd8] sm:$0xff]
    %v1661 = vld [vmem:[#allocation3 + $0xe0] sm:$0xff]
    %v1662 = vld [vmem:[#allocation3 + $0xe8] sm:$0xff]
    %v1663 = vld [vmem:[#allocation3 + $0xf0] sm:$0xff]
    %v1664 = vld [vmem:[#allocation3 + $0xf8] sm:$0xff]
    %v1665 = vld [vmem:[#allocation3 + $0x100] sm:$0xff]
    %v1666 = vld [vmem:[#allocation3 + $0x108] sm:$0xff]
    %v1667 = vld [vmem:[#allocation3 + $0x110] sm:$0xff]
    %v1668 = vld [vmem:[#allocation3 + $0x118] sm:$0xff]
    %v1669 = vld [vmem:[#allocation3 + $0x120] sm:$0xff]
    %v1670 = vld [vmem:[#allocation3 + $0x128] sm:$0xff]
    %v1671 = vld [vmem:[#allocation3 + $0x130] sm:$0xff]
    %v1672 = vld [vmem:[#allocation3 + $0x138] sm:$0xff]
    %v1673 = vld [vmem:[#allocation3 + $0x140] sm:$0xff]
    %v1674 = vld [vmem:[#allocation3 + $0x148] sm:$0xff]
    %v1675 = vld [vmem:[#allocation3 + $0x150] sm:$0xff]
    %v1676 = vld [vmem:[#allocation3 + $0x158] sm:$0xff]
    %v1677 = vld [vmem:[#allocation3 + $0x160] sm:$0xff]
    %v1678 = vld [vmem:[#allocation3 + $0x168] sm:$0xff]
    %v1679 = vld [vmem:[#allocation3 + $0x170] sm:$0xff]
    %v1680 = vld [vmem:[#allocation3 + $0x178] sm:$0xff]
    %v1681 = vld [vmem:[#allocation3 + $0x180] sm:$0xff]
    %v1682 = vld [vmem:[#allocation3 + $0x188] sm:$0xff]
    %v1683 = vld [vmem:[#allocation3 + $0x190] sm:$0xff]
    %v1684 = vld [vmem:[#allocation3 + $0x198] sm:$0xff]
    %v1685 = vld [vmem:[#allocation3 + $0x1a0] sm:$0xff]
    %v1686 = vld [vmem:[#allocation3 + $0x1a8] sm:$0xff]
    %v1687 = vld [vmem:[#allocation3 + $0x1b0] sm:$0xff]
    %v1688 = vld [vmem:[#allocation3 + $0x1b8] sm:$0xff]
    %v1689 = vld [vmem:[#allocation3 + $0x1c0] sm:$0xff]
    %v1690 = vld [vmem:[#allocation3 + $0x1c8] sm:$0xff]
    %v1691 = vld [vmem:[#allocation3 + $0x1d0] sm:$0xff]
    %v1692 = vld [vmem:[#allocation3 + $0x1d8] sm:$0xff]
    %v1693 = vld [vmem:[#allocation3 + $0x1e0] sm:$0xff]
    %v1694 = vld [vmem:[#allocation3 + $0x1e8] sm:$0xff]
    %v1695 = vld [vmem:[#allocation3 + $0x1f0] sm:$0xff]
    %v1696 = vld [vmem:[#allocation3 + $0x1f8] sm:$0xff]
    %1697 = vmatpush.msra.mxu0 %v1693
    %1698 = vmatpush.msra.mxu0 %v1689
    %1699 = vmatpush.msra.mxu0 %v1685
    %1700 = vmatpush.msra.mxu0 %v1681
    %1701 = vmatpush.msra.mxu0 %v1677
    %1702 = vmatpush.msra.mxu0 %v1673
    %1703 = vmatpush.msra.mxu0 %v1669
    %1704 = vmatpush.msra.mxu0 %v1665
    %1705 = vmatpush.msra.mxu0 %v1661
    %1706 = vmatpush.msra.mxu0 %v1657
    %1707 = vmatpush.msra.mxu0 %v1653
    %1708 = vmatpush.msra.mxu0 %v1649
    %1709 = vmatpush.msra.mxu0 %v1645
    %1710 = vmatpush.msra.mxu0 %v1641
    %1711 = vmatpush.msra.mxu0 %v1637
    %1712 = vmatpush.msra.mxu0 %v1633
    %1713 = vmatmul.f32.gmra.mxu0 %v1623
    %v1714 = vpop.f32.mrf.mxu0
    %v1715 = vadd.f32 0.0, %v1714
    %1716 = vdwg.mxu0
    %1717 = vmatpush.msra.mxu0 %v1694
    %1718 = vmatpush.msra.mxu0 %v1690
    %1719 = vmatpush.msra.mxu0 %v1686
    %1720 = vmatpush.msra.mxu0 %v1682
    %1721 = vmatpush.msra.mxu0 %v1678
    %1722 = vmatpush.msra.mxu0 %v1674
    %1723 = vmatpush.msra.mxu0 %v1670
    %1724 = vmatpush.msra.mxu0 %v1666
    %1725 = vmatpush.msra.mxu0 %v1662
    %1726 = vmatpush.msra.mxu0 %v1658
    %1727 = vmatpush.msra.mxu0 %v1654
    %1728 = vmatpush.msra.mxu0 %v1650
    %1729 = vmatpush.msra.mxu0 %v1646
    %1730 = vmatpush.msra.mxu0 %v1642
    %1731 = vmatpush.msra.mxu0 %v1638
    %1732 = vmatpush.msra.mxu0 %v1634
    %1733 = vmatmul.f32.gmra.mxu0 %v1623
    %v1734 = vpop.f32.mrf.mxu0
    %v1735 = vadd.f32 0.0, %v1734
    %1736 = vdwg.mxu0
    %1737 = vmatpush.msra.mxu0 %v1695
    %1738 = vmatpush.msra.mxu0 %v1691
    %1739 = vmatpush.msra.mxu0 %v1687
    %1740 = vmatpush.msra.mxu0 %v1683
    %1741 = vmatpush.msra.mxu0 %v1679
    %1742 = vmatpush.msra.mxu0 %v1675
    %1743 = vmatpush.msra.mxu0 %v1671
    %1744 = vmatpush.msra.mxu0 %v1667
    %1745 = vmatpush.msra.mxu0 %v1663
    %1746 = vmatpush.msra.mxu0 %v1659
    %1747 = vmatpush.msra.mxu0 %v1655
    %1748 = vmatpush.msra.mxu0 %v1651
    %1749 = vmatpush.msra.mxu0 %v1647
    %1750 = vmatpush.msra.mxu0 %v1643
    %1751 = vmatpush.msra.mxu0 %v1639
    %1752 = vmatpush.msra.mxu0 %v1635
    %1753 = vmatmul.f32.gmra.mxu0 %v1623
    %v1754 = vpop.f32.mrf.mxu0
    %v1755 = vadd.f32 0.0, %v1754
    %1756 = vdwg.mxu0
    %1757 = vmatpush.msra.mxu0 %v1696
    %1758 = vmatpush.msra.mxu0 %v1692
    %1759 = vmatpush.msra.mxu0 %v1688
    %1760 = vmatpush.msra.mxu0 %v1684
    %1761 = vmatpush.msra.mxu0 %v1680
    %1762 = vmatpush.msra.mxu0 %v1676
    %1763 = vmatpush.msra.mxu0 %v1672
    %1764 = vmatpush.msra.mxu0 %v1668
    %1765 = vmatpush.msra.mxu0 %v1664
    %1766 = vmatpush.msra.mxu0 %v1660
    %1767 = vmatpush.msra.mxu0 %v1656
    %1768 = vmatpush.msra.mxu0 %v1652
    %1769 = vmatpush.msra.mxu0 %v1648
    %1770 = vmatpush.msra.mxu0 %v1644
    %1771 = vmatpush.msra.mxu0 %v1640
    %1772 = vmatpush.msra.mxu0 %v1636
    %1773 = vmatmul.f32.gmra.mxu0 %v1623
    %v1774 = vpop.f32.mrf.mxu0
    %v1775 = vadd.f32 0.0, %v1774
    %1776 = vdwg.mxu0
    %v1777 = vadd.f32 %v1629, %v1715
    %v1778 = vadd.f32 %v1630, %v1735
    %v1779 = vadd.f32 %v1631, %v1755
    %v1780 = vadd.f32 %v1632, %v1775
    %v1781 = vxor.u32 %v1777, 2147483648
    %v1782 = vxor.u32 %v1778, 2147483648
    %v1783 = vxor.u32 %v1780, 2147483648
    %v1784 = vmul.f32 %v1781, 1.442695
    %v1785 = vpow.pop %v1784
    %v1786 = vmul.f32 %v1782, 1.442695
    %v1787 = vpow.pop %v1786
    %v1788 = vmul.f32 %v1783, 1.442695
    %v1789 = vpow.pop %v1788
    %v1790 = vadd.f32 %v1785, 1.0
    %v1791 = vadd.f32 %v1787, 1.0
    %v1792 = vadd.f32 %v1789, 1.0
    %v1793 = vrcp.pop %v1790
    %v1794 = vmul.f32 %v1790, %v1793
    %v1795 = vsub.f32 1.0, %v1794
    %v1796 = vmul.f32 %v1793, %v1795
    %v1797 = vadd.f32 %v1793, %v1796
    %vm1798 = vweird.f32 %v1790
    %vm1799 = vweird.f32 %v1793
    %vm1800 = vmor %vm1798, %vm1799
    %v1801 = vsel %vm1800, %v1793, %v1797
    %v1802 = vand.u32 2147483647, %v1790
    %vm1803 = vcmp.eq.f32.partialorder %v1802, 8.507059e+37
    %v1804 = vand.u32 %v1790, 2147483648
    %v1805 = vor.u32 1.1754944e-38, %v1804
    %v1806 = vsel %vm1803, %v1805, %v1801
    %v1807 = vmul.f32 1.0, %v1806
    %v1808 = vrcp.pop %v1791
    %v1809 = vmul.f32 %v1791, %v1808
    %v1810 = vsub.f32 1.0, %v1809
    %v1811 = vmul.f32 %v1808, %v1810
    %v1812 = vadd.f32 %v1808, %v1811
    %vm1813 = vweird.f32 %v1791
    %vm1814 = vweird.f32 %v1808
    %vm1815 = vmor %vm1813, %vm1814
    %v1816 = vsel %vm1815, %v1808, %v1812
    %v1817 = vand.u32 2147483647, %v1791
    %vm1818 = vcmp.eq.f32.partialorder %v1817, 8.507059e+37
    %v1819 = vand.u32 %v1791, 2147483648
    %v1820 = vor.u32 1.1754944e-38, %v1819
    %v1821 = vsel %vm1818, %v1820, %v1816
    %v1822 = vmul.f32 1.0, %v1821
    %v1823 = vrcp.pop %v1792
    %v1824 = vmul.f32 %v1792, %v1823
    %v1825 = vsub.f32 1.0, %v1824
    %v1826 = vmul.f32 %v1823, %v1825
    %v1827 = vadd.f32 %v1823, %v1826
    %vm1828 = vweird.f32 %v1792
    %vm1829 = vweird.f32 %v1823
    %vm1830 = vmor %vm1828, %vm1829
    %v1831 = vsel %vm1830, %v1823, %v1827
    %v1832 = vand.u32 2147483647, %v1792
    %vm1833 = vcmp.eq.f32.partialorder %v1832, 8.507059e+37
    %v1834 = vand.u32 %v1792, 2147483648
    %v1835 = vor.u32 1.1754944e-38, %v1834
    %v1836 = vsel %vm1833, %v1835, %v1831
    %v1837 = vmul.f32 1.0, %v1836
    %v1838 = vtanh.pop %v1779
    %v1839 = vmul.f32 %v1822, %v1621
    %v1840 = vmul.f32 %v1807, %v1838
    %v1841 = vadd.f32 %v1839, %v1840
    %v1842 = vtanh.pop %v1841
    %v1843 = vmul.f32 %v1837, %v1842
    %s1844 = scalar_lea.vmem [#allocation8], 48
    %1845 = vst [vmem:[%s1844] sm:$0xff] %v1843
    %s1846 = smul.u32 7, 4
    %s1847 = smul.addr %s1846, 8
    %s1848 = scalar_lea.vmem [#allocation2], %s1847
    %v1849 = vld [vmem:[%s1848] sm:$0xff]
    %v1850 = vld [vmem:[%s1848 + $0x8] sm:$0xff]
    %v1851 = vld [vmem:[%s1848 + $0x10] sm:$0xff]
    %v1852 = vld [vmem:[%s1848 + $0x18] sm:$0xff]
    %v1853 = vld [vmem:[#allocation3] sm:$0xff]
    %v1854 = vld [vmem:[#allocation3 + $0x8] sm:$0xff]
    %v1855 = vld [vmem:[#allocation3 + $0x10] sm:$0xff]
    %v1856 = vld [vmem:[#allocation3 + $0x18] sm:$0xff]
    %v1857 = vld [vmem:[#allocation3 + $0x20] sm:$0xff]
    %v1858 = vld [vmem:[#allocation3 + $0x28] sm:$0xff]
    %v1859 = vld [vmem:[#allocation3 + $0x30] sm:$0xff]
    %v1860 = vld [vmem:[#allocation3 + $0x38] sm:$0xff]
    %v1861 = vld [vmem:[#allocation3 + $0x40] sm:$0xff]
    %v1862 = vld [vmem:[#allocation3 + $0x48] sm:$0xff]
    %v1863 = vld [vmem:[#allocation3 + $0x50] sm:$0xff]
    %v1864 = vld [vmem:[#allocation3 + $0x58] sm:$0xff]
    %v1865 = vld [vmem:[#allocation3 + $0x60] sm:$0xff]
    %v1866 = vld [vmem:[#allocation3 + $0x68] sm:$0xff]
    %v1867 = vld [vmem:[#allocation3 + $0x70] sm:$0xff]
    %v1868 = vld [vmem:[#allocation3 + $0x78] sm:$0xff]
    %v1869 = vld [vmem:[#allocation3 + $0x80] sm:$0xff]
    %v1870 = vld [vmem:[#allocation3 + $0x88] sm:$0xff]
    %v1871 = vld [vmem:[#allocation3 + $0x90] sm:$0xff]
    %v1872 = vld [vmem:[#allocation3 + $0x98] sm:$0xff]
    %v1873 = vld [vmem:[#allocation3 + $0xa0] sm:$0xff]
    %v1874 = vld [vmem:[#allocation3 + $0xa8] sm:$0xff]
    %v1875 = vld [vmem:[#allocation3 + $0xb0] sm:$0xff]
    %v1876 = vld [vmem:[#allocation3 + $0xb8] sm:$0xff]
    %v1877 = vld [vmem:[#allocation3 + $0xc0] sm:$0xff]
    %v1878 = vld [vmem:[#allocation3 + $0xc8] sm:$0xff]
    %v1879 = vld [vmem:[#allocation3 + $0xd0] sm:$0xff]
    %v1880 = vld [vmem:[#allocation3 + $0xd8] sm:$0xff]
    %v1881 = vld [vmem:[#allocation3 + $0xe0] sm:$0xff]
    %v1882 = vld [vmem:[#allocation3 + $0xe8] sm:$0xff]
    %v1883 = vld [vmem:[#allocation3 + $0xf0] sm:$0xff]
    %v1884 = vld [vmem:[#allocation3 + $0xf8] sm:$0xff]
    %v1885 = vld [vmem:[#allocation3 + $0x100] sm:$0xff]
    %v1886 = vld [vmem:[#allocation3 + $0x108] sm:$0xff]
    %v1887 = vld [vmem:[#allocation3 + $0x110] sm:$0xff]
    %v1888 = vld [vmem:[#allocation3 + $0x118] sm:$0xff]
    %v1889 = vld [vmem:[#allocation3 + $0x120] sm:$0xff]
    %v1890 = vld [vmem:[#allocation3 + $0x128] sm:$0xff]
    %v1891 = vld [vmem:[#allocation3 + $0x130] sm:$0xff]
    %v1892 = vld [vmem:[#allocation3 + $0x138] sm:$0xff]
    %v1893 = vld [vmem:[#allocation3 + $0x140] sm:$0xff]
    %v1894 = vld [vmem:[#allocation3 + $0x148] sm:$0xff]
    %v1895 = vld [vmem:[#allocation3 + $0x150] sm:$0xff]
    %v1896 = vld [vmem:[#allocation3 + $0x158] sm:$0xff]
    %v1897 = vld [vmem:[#allocation3 + $0x160] sm:$0xff]
    %v1898 = vld [vmem:[#allocation3 + $0x168] sm:$0xff]
    %v1899 = vld [vmem:[#allocation3 + $0x170] sm:$0xff]
    %v1900 = vld [vmem:[#allocation3 + $0x178] sm:$0xff]
    %v1901 = vld [vmem:[#allocation3 + $0x180] sm:$0xff]
    %v1902 = vld [vmem:[#allocation3 + $0x188] sm:$0xff]
    %v1903 = vld [vmem:[#allocation3 + $0x190] sm:$0xff]
    %v1904 = vld [vmem:[#allocation3 + $0x198] sm:$0xff]
    %v1905 = vld [vmem:[#allocation3 + $0x1a0] sm:$0xff]
    %v1906 = vld [vmem:[#allocation3 + $0x1a8] sm:$0xff]
    %v1907 = vld [vmem:[#allocation3 + $0x1b0] sm:$0xff]
    %v1908 = vld [vmem:[#allocation3 + $0x1b8] sm:$0xff]
    %v1909 = vld [vmem:[#allocation3 + $0x1c0] sm:$0xff]
    %v1910 = vld [vmem:[#allocation3 + $0x1c8] sm:$0xff]
    %v1911 = vld [vmem:[#allocation3 + $0x1d0] sm:$0xff]
    %v1912 = vld [vmem:[#allocation3 + $0x1d8] sm:$0xff]
    %v1913 = vld [vmem:[#allocation3 + $0x1e0] sm:$0xff]
    %v1914 = vld [vmem:[#allocation3 + $0x1e8] sm:$0xff]
    %v1915 = vld [vmem:[#allocation3 + $0x1f0] sm:$0xff]
    %v1916 = vld [vmem:[#allocation3 + $0x1f8] sm:$0xff]
    %1917 = vmatpush.msra.mxu0 %v1913
    %1918 = vmatpush.msra.mxu0 %v1909
    %1919 = vmatpush.msra.mxu0 %v1905
    %1920 = vmatpush.msra.mxu0 %v1901
    %1921 = vmatpush.msra.mxu0 %v1897
    %1922 = vmatpush.msra.mxu0 %v1893
    %1923 = vmatpush.msra.mxu0 %v1889
    %1924 = vmatpush.msra.mxu0 %v1885
    %1925 = vmatpush.msra.mxu0 %v1881
    %1926 = vmatpush.msra.mxu0 %v1877
    %1927 = vmatpush.msra.mxu0 %v1873
    %1928 = vmatpush.msra.mxu0 %v1869
    %1929 = vmatpush.msra.mxu0 %v1865
    %1930 = vmatpush.msra.mxu0 %v1861
    %1931 = vmatpush.msra.mxu0 %v1857
    %1932 = vmatpush.msra.mxu0 %v1853
    %1933 = vmatmul.f32.gmra.mxu0 %v1843
    %v1934 = vpop.f32.mrf.mxu0
    %v1935 = vadd.f32 0.0, %v1934
    %1936 = vdwg.mxu0
    %1937 = vmatpush.msra.mxu0 %v1914
    %1938 = vmatpush.msra.mxu0 %v1910
    %1939 = vmatpush.msra.mxu0 %v1906
    %1940 = vmatpush.msra.mxu0 %v1902
    %1941 = vmatpush.msra.mxu0 %v1898
    %1942 = vmatpush.msra.mxu0 %v1894
    %1943 = vmatpush.msra.mxu0 %v1890
    %1944 = vmatpush.msra.mxu0 %v1886
    %1945 = vmatpush.msra.mxu0 %v1882
    %1946 = vmatpush.msra.mxu0 %v1878
    %1947 = vmatpush.msra.mxu0 %v1874
    %1948 = vmatpush.msra.mxu0 %v1870
    %1949 = vmatpush.msra.mxu0 %v1866
    %1950 = vmatpush.msra.mxu0 %v1862
    %1951 = vmatpush.msra.mxu0 %v1858
    %1952 = vmatpush.msra.mxu0 %v1854
    %1953 = vmatmul.f32.gmra.mxu0 %v1843
    %v1954 = vpop.f32.mrf.mxu0
    %v1955 = vadd.f32 0.0, %v1954
    %1956 = vdwg.mxu0
    %1957 = vmatpush.msra.mxu0 %v1915
    %1958 = vmatpush.msra.mxu0 %v1911
    %1959 = vmatpush.msra.mxu0 %v1907
    %1960 = vmatpush.msra.mxu0 %v1903
    %1961 = vmatpush.msra.mxu0 %v1899
    %1962 = vmatpush.msra.mxu0 %v1895
    %1963 = vmatpush.msra.mxu0 %v1891
    %1964 = vmatpush.msra.mxu0 %v1887
    %1965 = vmatpush.msra.mxu0 %v1883
    %1966 = vmatpush.msra.mxu0 %v1879
    %1967 = vmatpush.msra.mxu0 %v1875
    %1968 = vmatpush.msra.mxu0 %v1871
    %1969 = vmatpush.msra.mxu0 %v1867
    %1970 = vmatpush.msra.mxu0 %v1863
    %1971 = vmatpush.msra.mxu0 %v1859
    %1972 = vmatpush.msra.mxu0 %v1855
    %1973 = vmatmul.f32.gmra.mxu0 %v1843
    %v1974 = vpop.f32.mrf.mxu0
    %v1975 = vadd.f32 0.0, %v1974
    %1976 = vdwg.mxu0
    %1977 = vmatpush.msra.mxu0 %v1916
    %1978 = vmatpush.msra.mxu0 %v1912
    %1979 = vmatpush.msra.mxu0 %v1908
    %1980 = vmatpush.msra.mxu0 %v1904
    %1981 = vmatpush.msra.mxu0 %v1900
    %1982 = vmatpush.msra.mxu0 %v1896
    %1983 = vmatpush.msra.mxu0 %v1892
    %1984 = vmatpush.msra.mxu0 %v1888
    %1985 = vmatpush.msra.mxu0 %v1884
    %1986 = vmatpush.msra.mxu0 %v1880
    %1987 = vmatpush.msra.mxu0 %v1876
    %1988 = vmatpush.msra.mxu0 %v1872
    %1989 = vmatpush.msra.mxu0 %v1868
    %1990 = vmatpush.msra.mxu0 %v1864
    %1991 = vmatpush.msra.mxu0 %v1860
    %1992 = vmatpush.msra.mxu0 %v1856
    %1993 = vmatmul.f32.gmra.mxu0 %v1843
    %v1994 = vpop.f32.mrf.mxu0
    %v1995 = vadd.f32 0.0, %v1994
    %1996 = vdwg.mxu0
    %v1997 = vadd.f32 %v1849, %v1935
    %v1998 = vadd.f32 %v1850, %v1955
    %v1999 = vadd.f32 %v1851, %v1975
    %v2000 = vadd.f32 %v1852, %v1995
    %v2001 = vxor.u32 %v1997, 2147483648
    %v2002 = vxor.u32 %v1998, 2147483648
    %v2003 = vxor.u32 %v2000, 2147483648
    %v2004 = vmul.f32 %v2001, 1.442695
    %v2005 = vpow.pop %v2004
    %v2006 = vmul.f32 %v2002, 1.442695
    %v2007 = vpow.pop %v2006
    %v2008 = vmul.f32 %v2003, 1.442695
    %v2009 = vpow.pop %v2008
    %v2010 = vadd.f32 %v2005, 1.0
    %v2011 = vadd.f32 %v2007, 1.0
    %v2012 = vadd.f32 %v2009, 1.0
    %v2013 = vrcp.pop %v2010
    %v2014 = vmul.f32 %v2010, %v2013
    %v2015 = vsub.f32 1.0, %v2014
    %v2016 = vmul.f32 %v2013, %v2015
    %v2017 = vadd.f32 %v2013, %v2016
    %vm2018 = vweird.f32 %v2010
    %vm2019 = vweird.f32 %v2013
    %vm2020 = vmor %vm2018, %vm2019
    %v2021 = vsel %vm2020, %v2013, %v2017
    %v2022 = vand.u32 2147483647, %v2010
    %vm2023 = vcmp.eq.f32.partialorder %v2022, 8.507059e+37
    %v2024 = vand.u32 %v2010, 2147483648
    %v2025 = vor.u32 1.1754944e-38, %v2024
    %v2026 = vsel %vm2023, %v2025, %v2021
    %v2027 = vmul.f32 1.0, %v2026
    %v2028 = vrcp.pop %v2011
    %v2029 = vmul.f32 %v2011, %v2028
    %v2030 = vsub.f32 1.0, %v2029
    %v2031 = vmul.f32 %v2028, %v2030
    %v2032 = vadd.f32 %v2028, %v2031
    %vm2033 = vweird.f32 %v2011
    %vm2034 = vweird.f32 %v2028
    %vm2035 = vmor %vm2033, %vm2034
    %v2036 = vsel %vm2035, %v2028, %v2032
    %v2037 = vand.u32 2147483647, %v2011
    %vm2038 = vcmp.eq.f32.partialorder %v2037, 8.507059e+37
    %v2039 = vand.u32 %v2011, 2147483648
    %v2040 = vor.u32 1.1754944e-38, %v2039
    %v2041 = vsel %vm2038, %v2040, %v2036
    %v2042 = vmul.f32 1.0, %v2041
    %v2043 = vrcp.pop %v2012
    %v2044 = vmul.f32 %v2012, %v2043
    %v2045 = vsub.f32 1.0, %v2044
    %v2046 = vmul.f32 %v2043, %v2045
    %v2047 = vadd.f32 %v2043, %v2046
    %vm2048 = vweird.f32 %v2012
    %vm2049 = vweird.f32 %v2043
    %vm2050 = vmor %vm2048, %vm2049
    %v2051 = vsel %vm2050, %v2043, %v2047
    %v2052 = vand.u32 2147483647, %v2012
    %vm2053 = vcmp.eq.f32.partialorder %v2052, 8.507059e+37
    %v2054 = vand.u32 %v2012, 2147483648
    %v2055 = vor.u32 1.1754944e-38, %v2054
    %v2056 = vsel %vm2053, %v2055, %v2051
    %v2057 = vmul.f32 1.0, %v2056
    %v2058 = vtanh.pop %v1999
    %v2059 = vmul.f32 %v2042, %v1841
    %v2060 = vmul.f32 %v2027, %v2058
    %v2061 = vadd.f32 %v2059, %v2060
    %v2062 = vtanh.pop %v2061
    %v2063 = vmul.f32 %v2057, %v2062
    %s2064 = scalar_lea.vmem [#allocation8], 56
    %2065 = vst [vmem:[%s2064] sm:$0xff] %v2063
    %2066 = vst [vmem:[#allocation9] sm:$0xff] %v2063
    %2067 = vst [vmem:[#allocation11] sm:$0xff] %v2061
    // Predicated region
    $region34: #{tpu_custom_call.1} parent=1 // pred_check
      _
    $region35: #{tpu_custom_call.1} parent=1 // pred_check_branch
      %2069 = sbr.rel (0) target = $region37
    $region36: #{tpu_custom_call.1} parent=1 // pred_region
      %2071 = vsyncadd [#allocation5], 0
      %s2072 = sshll.u32 [#allocation8], 4
      %s2073 = int_to_ptr.vmem [resolvable:$true] %s2072
      %s2074 = sshll.u32 %s6, 4
      %s2075 = int_to_ptr.hbm [resolvable:$true] %s2074
      %2080 = dma.vmem_to_hbm [thread:$0]  %s2073, 1024, %s2075, [#allocation5], 128, 128, 8
    $region37: #{tpu_custom_call.1} parent=1 // pred_fallthru
      _
    // Predicated region
    $region38: #{tpu_custom_call.1} parent=1 // pred_check
      _
    $region39: #{tpu_custom_call.1} parent=1 // pred_check_branch
      %2082 = sbr.rel (0) target = $region41
    $region40: #{tpu_custom_call.1} parent=1 // pred_region
      %2084 = vsyncadd [#allocation10], 0
      %s2086 = sshll.u32 [#allocation9], 4
      %s2087 = int_to_ptr.vmem [resolvable:$true] %s2086
      %s2088 = sshll.u32 %s7, 4
      %s2089 = int_to_ptr.hbm [resolvable:$true] %s2088
      %2091 = dma.vmem_to_hbm [thread:$0]  %s2087, 128, %s2089, [#allocation10]
    $region41: #{tpu_custom_call.1} parent=1 // pred_fallthru
      _
    // Predicated region
    $region42: #{tpu_custom_call.1} parent=1 // pred_check
      _
    $region43: #{tpu_custom_call.1} parent=1 // pred_check_branch
      %2093 = sbr.rel (0) target = $region45
    $region44: #{tpu_custom_call.1} parent=1 // pred_region
      %2095 = vsyncadd [#allocation10], 0
      %s2097 = sshll.u32 [#allocation11], 4
      %s2098 = int_to_ptr.vmem [resolvable:$true] %s2097
      %s2099 = sshll.u32 %s8, 4
      %s2100 = int_to_ptr.hbm [resolvable:$true] %s2099
      %2102 = dma.vmem_to_hbm [thread:$0]  %s2098, 128, %s2100, [#allocation10]
    $region45: #{tpu_custom_call.1} parent=1 // pred_fallthru
      _
    // Predicated region
    $region46: #{tpu_custom_call.1} parent=1 // pred_check
      _
    $region47: #{tpu_custom_call.1} parent=1 // pred_check_branch
      %2104 = sbr.rel (0) target = $region49
    $region48: #{tpu_custom_call.1} parent=1 // pred_region
      %2106 = dma.done [#allocation5], 1024
    $region49: #{tpu_custom_call.1} parent=1 // pred_fallthru
      _
    // Predicated region
    $region50: #{tpu_custom_call.1} parent=1 // pred_check
      _
    $region51: #{tpu_custom_call.1} parent=1 // pred_check_branch
      %2108 = sbr.rel (0) target = $region53
    $region52: #{tpu_custom_call.1} parent=1 // pred_region
      %2110 = dma.done [#allocation10], 128
    $region53: #{tpu_custom_call.1} parent=1 // pred_fallthru
      _
    // Predicated region
    $region54: #{tpu_custom_call.1} parent=1 // pred_check
      _
    $region55: #{tpu_custom_call.1} parent=1 // pred_check_branch
      %2112 = sbr.rel (0) target = $region57
    $region56: #{tpu_custom_call.1} parent=1 // pred_region
      %2114 = dma.done [#allocation10], 128
    $region57: #{tpu_custom_call.1} parent=1 // pred_fallthru
      _
    %2115 = vsyncpa [#allocation4], 1
    %2116 = vsyncpa [#allocation7], 1
    %2117 = vsyncpa [#allocation5], 1
    %2118 = vsyncpa [#allocation10], 1

</llo_original>
